<compile_context>
chip_gen: v7x
topology: tpu7x:2x2x1
jax: 0.10.0
libtpu: 0.0.40
codegen_flags: <defaults>
</compile_context>

<pallas_src>
import functools

import jax
import jax.numpy as jnp
from jax import lax
from jax.experimental import pallas as pl
from jax.experimental.pallas import tpu as pltpu


def _round_up(x, m):
    return (x + m - 1) // m * m


def _vmem_limit_bytes():
    """Per-generation scoped-VMEM limit: 64 MiB on 128-MiB parts (v5e/v6e),
    48 MiB on v7x (64 MiB physical), 32 MiB fallback if the query fails."""
    try:
        cap = int(getattr(pltpu.get_tpu_info(), "vmem_capacity_bytes", 128 << 20))
    except Exception:
        return 32 << 20
    return int(min(64 << 20, (cap * 3) // 4))


def _ang_kernel(x_ref, w1_ref, w2_ref, o_ref, t_ref):
    # x_ref: [Cin1, tm]  w1_ref: [C, Cin1]  w2_ref: [rrC, C]  o_ref: [rrC, tm]
    # t_ref: VMEM scratch [C, tm] staging ReLU(AngBottle(xa)) so very large lane
    # tiles never hold the intermediate in vregs.
    t = jnp.dot(w1_ref[...], x_ref[...], preferred_element_type=jnp.float32)
    t_ref[...] = jnp.maximum(t, 0.0).astype(t_ref.dtype)
    o_ref[...] = jnp.dot(w2_ref[...], t_ref[...],
                         preferred_element_type=jnp.float32).astype(o_ref.dtype)


def _spa_kernel(x_ref, w_ref, o_ref, *, r, tile_h, Wp):
    # x_ref: [Cin2, win]  (one halo window: tile_h + 2r + 1 padded rows, flat)
    # w_ref: [9, C, Cin2] (merged xs/a2s weights per tap)
    # o_ref: [C, tile_h*Wp]  "wide" rows, written exactly once (ReLU fused).
    L = tile_h * Wp
    acc = None
    for ky in range(3):
        for kx in range(3):
            t = ky * 3 + kx
            s = (ky * r) * Wp + kx * r      # static lane offset of this tap
            # NOTE: s is generally not 128-aligned; the per-vreg realignment
            # rides the otherwise-idle XLU slot and hides under MXU/DMA.
            c = jnp.dot(w_ref[t], x_ref[:, s:s + L],
                        preferred_element_type=jnp.float32)
            acc = c if acc is None else acc + c
    o_ref[...] = jnp.maximum(acc, 0.0)


def bottleneck_forward(xa_nchw, xs_nchw, w_ang, w_a2s, w_spa, ang_res, *,
                       tile_m=None, tile_h=None, compute_dtype=jnp.float32):
    """BottleNeck.forward.  xa/xs NCHW, weights OIHW (PyTorch conventions).

    compute_dtype=jnp.bfloat16 halves HBM traffic / doubles MXU rate of both
    (memory-bound) kernels; accumulation stays f32 and the output is f32.
    """
    B, Cin1, Ha, Wa = xa_nchw.shape
    C = int(w_ang.shape[0])
    r = int(ang_res)
    Hs, Ws = Ha * r, Wa * r
    Cs = int(xs_nchw.shape[1])
    Cin2 = Cs + C                       # torch.cat((xs, a2s), 1) channel count
    rrC = r * r * C
    cdt = jnp.dtype(compute_dtype)
    isz = cdt.itemsize
    vmem = _vmem_limit_bytes()

    # ---- Kernel 1: AngBottle (1x1) + ReLU + Ang2Spa (1x1), tiled over pixels ----
    M = Ha * Wa
    if tile_m is None:
        # Large lane tiles amortize the ~0.35us/step overhead for this
        # bandwidth-bound 1x1 conv; bounded by a VMEM budget (dbl-buffered).
        budget = min(vmem // 4, 8 << 20)
        per_lane = 2 * isz * (Cin1 + rrC) + isz * C
        tile_m = max(128, min(8192, (budget // per_lane) // 128 * 128))
    tm = _round_up(max(128, int(tile_m)), 128)
    tm = min(tm, _round_up(M, 128))
    Mpad = _round_up(M, tm)

    xa_flat = xa_nchw.astype(cdt).reshape(B, Cin1, M)
    if Mpad != M:                        # zero tail -> zero outputs, trimmed below
        xa_flat = jnp.pad(xa_flat, ((0, 0), (0, 0), (0, Mpad - M)))
    w1 = w_ang[:, :, 0, 0].astype(cdt)   # [C, Cin1]
    w2 = w_a2s[:, :, 0, 0].astype(cdt)   # [rrC, C]

    y = pl.pallas_call(
        _ang_kernel,
        out_shape=jax.ShapeDtypeStruct((B, rrC, Mpad), cdt),
        grid=(B, Mpad // tm),
        in_specs=[
            pl.BlockSpec((None, Cin1, tm), lambda b, j: (b, 0, j)),
            pl.BlockSpec((C, Cin1), lambda b, j: (0, 0)),
            pl.BlockSpec((rrC, C), lambda b, j: (0, 0)),
        ],
        out_specs=pl.BlockSpec((None, rrC, tm), lambda b, j: (b, 0, j)),
        scratch_shapes=[pltpu.VMEM((C, tm), cdt)],
        compiler_params=pltpu.CompilerParams(
            dimension_semantics=("parallel", "parallel"),
            vmem_limit_bytes=vmem),
    )(xa_flat, w1, w2)

    # ---- PixelShuffle(r): layout glue (channel k = c*r*r + i*r + j) ----
    y = y[:, :, :M].reshape(B, C, r, r, Ha, Wa)
    a2s = jnp.transpose(y, (0, 1, 4, 2, 5, 3)).reshape(B, C, Hs, Ws)   # NCHW, cdt

    # ---- Kernel 2: SpaBottle 3x3, dilation=r, padding=r, + ReLU (concat fused) ----
    Wp = Ws + 2 * r
    if tile_h is None:
        # Largest row tile that (a) divides Hs, (b) keeps the output block
        # lane-dense ((tile_h*Wp) % 128 == 0, or the whole image), (c) fits the
        # double-buffered halo window + output block in a VMEM budget.
        budget = min(vmem // 4, 6 << 20)
        cands = [th for th in range(Hs, 0, -1)
                 if Hs % th == 0 and (th == Hs or (th * Wp) % 128 == 0)]
        tile_h = cands[-1]
        for th in cands:
            need = 2 * (isz * Cin2 * (th + 2 * r + 1) * Wp + 4 * C * th * Wp)
            if need <= budget:
                tile_h = th
                break
    else:
        tile_h = int(tile_h)
        assert Hs % tile_h == 0 and (tile_h == Hs or (tile_h * Wp) % 128 == 0), \
            "tile_h must divide Hs and keep tile_h*Wp a multiple of 128"
    n_tiles = Hs // tile_h
    win = (tile_h + 2 * r + 1) * Wp      # tile rows + 2r halo rows + 1 zero row
    Lout = Hs * Wp

    # Concat + zero-pad + per-row-tile halo windows (all copy-like XLA glue in
    # one jit region so it fuses into a single materialization of xwin).
    # TODO(synk): fold the zero-pad into the kernel via boundary-tap masking to
    # drop this extra HBM pass entirely.
    xcat = jnp.concatenate([xs_nchw.astype(cdt), a2s], axis=1)     # [B, Cin2, Hs, Ws]
    xpad = jnp.pad(xcat, ((0, 0), (0, 0), (r, r + 1), (r, r)))     # +1 bottom zero row
    xflat = xpad.reshape(B, Cin2, (Hs + 2 * r + 1) * Wp)
    if n_tiles == 1:
        xwin = xflat[:, None]                                      # [B, 1, Cin2, win]
    else:
        idx = (jnp.arange(n_tiles) * (tile_h * Wp))[:, None] + jnp.arange(win)[None, :]
        xwin = jnp.take(xflat, idx.reshape(-1), axis=2)
        xwin = xwin.reshape(B, Cin2, n_tiles, win).transpose(0, 2, 1, 3)

    # Merged per-tap weights: one [C, Cs+Ca] contraction per tap (9 matmuls,
    # not 18), matching the channel order of torch.cat((xs, a2s), 1).
    w_taps = jnp.transpose(w_spa, (2, 3, 0, 1)).reshape(9, C, Cin2).astype(cdt)

    out_wide = pl.pallas_call(
        functools.partial(_spa_kernel, r=r, tile_h=tile_h, Wp=Wp),
        out_shape=jax.ShapeDtypeStruct((B, C, Lout), jnp.float32),
        grid=(B, n_tiles),
        in_specs=[
            pl.BlockSpec((None, None, Cin2, win), lambda b, j: (b, j, 0, 0)),
            pl.BlockSpec((9, C, Cin2), lambda b, j: (0, 0, 0)),
        ],
        out_specs=pl.BlockSpec((None, C, tile_h * Wp), lambda b, j: (b, 0, j)),
        compiler_params=pltpu.CompilerParams(
            dimension_semantics=("parallel", "parallel"),
            vmem_limit_bytes=vmem),
    )(xwin, w_taps)

    # Already NCHW-ordered; drop the 2r junk columns per wide row.
    return out_wide.reshape(B, C, Hs, Wp)[:, :, :, :Ws]


def bottleneck_reference(xa, xs, w_ang, w_a2s, w_spa, r):
    """Pure-JAX reference mirroring the PyTorch module exactly (NCHW)."""
    dn = ("NCHW", "OIHW", "NCHW")
    t = jax.nn.relu(lax.conv_general_dilated(xa, w_ang, (1, 1), "VALID",
                                             dimension_numbers=dn))
    y = lax.conv_general_dilated(t, w_a2s, (1, 1), "VALID", dimension_numbers=dn)
    B, C2, H, W = y.shape
    C = C2 // (r * r)
    y = y.reshape(B, C, r, r, H, W).transpose(0, 1, 4, 2, 5, 3).reshape(B, C, H * r, W * r)
    xcat = jnp.concatenate([xs, y], axis=1)
    out = lax.conv_general_dilated(xcat, w_spa, (1, 1), [(r, r), (r, r)],
                                   rhs_dilation=(r, r), dimension_numbers=dn)
    return jax.nn.relu(out)


if __name__ == "__main__":
    ang_res, n_blocks, channels = 2, 3, 4
    B, Ha, Wa = 2, 16, 10                      # non-round Wa exercises tail padding
    Hs, Ws = Ha * ang_res, Wa * ang_res

    key = jax.random.PRNGKey(0)
    k = jax.random.split(key, 5)
    xa = jax.random.normal(k[0], (B, n_blocks * channels, Ha, Wa), jnp.float32)
    xs = jax.random.normal(k[1], (B, n_blocks * channels, Hs, Ws), jnp.float32)
    w_ang = 0.1 * jax.random.normal(k[2], (channels, n_blocks * channels, 1, 1), jnp.float32)
    w_a2s = 0.1 * jax.random.normal(k[3], (ang_res * ang_res * channels, channels, 1, 1), jnp.float32)
    w_spa = 0.1 * jax.random.normal(k[4], (channels, (n_blocks + 1) * channels, 3, 3), jnp.float32)

    ref = bottleneck_reference(xa, xs, w_ang, w_a2s, w_spa, ang_res)

    # f32 path with small explicit tiles: exercises multi-tile pixel grid
    # (kernel 1) and row-tiled halo windows (kernel 2); strict check.
    fwd32 = jax.jit(lambda a, s, wA, w2, w3: bottleneck_forward(
        a, s, wA, w2, w3, ang_res, tile_m=128, tile_h=16))
    out32 = jax.block_until_ready(fwd32(xa, xs, w_ang, w_a2s, w_spa))
    assert out32.shape == (B, channels, Hs, Ws), out32.shape
    err32 = float(jnp.max(jnp.abs(out32 - ref)))
    assert jnp.allclose(out32, ref, atol=1e-4, rtol=1e-4), err32

    # bf16-operand path with auto tile sizes (halves HBM traffic on v6e/v7x);
    # f32 accumulation -> loose sanity check.
    fwd16 = jax.jit(lambda a, s, wA, w2, w3: bottleneck_forward(
        a, s, wA, w2, w3, ang_res, compute_dtype=jnp.bfloat16))
    out16 = jax.block_until_ready(fwd16(xa, xs, w_ang, w_a2s, w_spa))
    assert out16.shape == (B, channels, Hs, Ws), out16.shape
    assert bool(jnp.all(jnp.isfinite(out16)))
    err16 = float(jnp.max(jnp.abs(out16 - ref)))
    assert err16 < 0.25, err16

    print("KERNEL_OK")
</pallas_src>

<mosaic_0001>
module attributes {stable_mosaic.version = 11 : i64} {
  func.func @_ang_kernel(%arg0: i32, %arg1: i32, %arg2: memref<1x12x128xf32, #tpu.memory_space<vmem>>, %arg3: memref<4x12xf32, #tpu.memory_space<vmem>>, %arg4: memref<16x4xf32, #tpu.memory_space<vmem>>, %arg5: memref<1x16x128xf32, #tpu.memory_space<vmem>>, %arg6: memref<4x128xf32, #tpu.memory_space<vmem>>) attributes {dimension_semantics = [#tpu.dimension_semantics<parallel>, #tpu.dimension_semantics<parallel>], iteration_bounds = array<i64: 2, 2>, scalar_prefetch = 0 : i64, scratch_operands = 1 : i64, tpu.core_type = #tpu.core_type<tc>, window_params = [{transform_indices = @transform_0, window_bounds = array<i64: 1, 12, 128>}, {pipeline_mode = #tpu.pipeline_mode<synchronous>, transform_indices = @transform_1, window_bounds = array<i64: 4, 12>}, {pipeline_mode = #tpu.pipeline_mode<synchronous>, transform_indices = @transform_2, window_bounds = array<i64: 16, 4>}, {transform_indices = @transform_3, window_bounds = array<i64: 1, 16, 128>}]} {
    %c0 = arith.constant 0 : index
    %c0_0 = arith.constant 0 : index
    %0 = vector.load %arg3[%c0, %c0_0] : memref<4x12xf32, #tpu.memory_space<vmem>>, vector<4x12xf32>
    %c0_1 = arith.constant 0 : index
    %c0_2 = arith.constant 0 : index
    %c0_3 = arith.constant 0 : index
    %1 = vector.load %arg2[%c0_1, %c0_2, %c0_3] : memref<1x12x128xf32, #tpu.memory_space<vmem>>, vector<1x12x128xf32>
    %2 = vector.shape_cast %1 : vector<1x12x128xf32> to vector<12x128xf32>
    %cst = arith.constant dense<0.000000e+00> : vector<4x128xf32>
    %3 = tpu.matmul %0, %2, %cst {dimension_numbers = #tpu.dot_dimension_numbers<[1], [0], [0], [1], [0, 0, 1, 1], [], []>} : vector<4x12xf32>, vector<12x128xf32>, vector<4x128xf32> -> vector<4x128xf32>
    %cst_4 = arith.constant 0.000000e+00 : f32
    %4 = vector.broadcast %cst_4 : f32 to vector<4x128xf32>
    %5 = arith.maximumf %3, %4 : vector<4x128xf32>
    %c0_5 = arith.constant 0 : index
    %c0_6 = arith.constant 0 : index
    %6 = vector.load %arg6[%c0_5, %c0_6] : memref<4x128xf32, #tpu.memory_space<vmem>>, vector<4x128xf32>
    tpu.vector_store %arg6[%c0_5, %c0_6], %5 {strides = array<i32>} : memref<4x128xf32, #tpu.memory_space<vmem>>, vector<4x128xf32>,
    %c0_7 = arith.constant 0 : index
    %c0_8 = arith.constant 0 : index
    %7 = vector.load %arg4[%c0_7, %c0_8] : memref<16x4xf32, #tpu.memory_space<vmem>>, vector<16x4xf32>
    %c0_9 = arith.constant 0 : index
    %c0_10 = arith.constant 0 : index
    %8 = vector.load %arg6[%c0_9, %c0_10] : memref<4x128xf32, #tpu.memory_space<vmem>>, vector<4x128xf32>
    %cst_11 = arith.constant dense<0.000000e+00> : vector<16x128xf32>
    %9 = tpu.matmul %7, %8, %cst_11 {dimension_numbers = #tpu.dot_dimension_numbers<[1], [0], [0], [1], [0, 0, 1, 1], [], []>} : vector<16x4xf32>, vector<4x128xf32>, vector<16x128xf32> -> vector<16x128xf32>
    %c0_12 = arith.constant 0 : index
    %c0_13 = arith.constant 0 : index
    %c0_14 = arith.constant 0 : index
    %10 = vector.load %arg5[%c0_12, %c0_13, %c0_14] : memref<1x16x128xf32, #tpu.memory_space<vmem>>, vector<1x16x128xf32>
    %11 = vector.shape_cast %10 : vector<1x16x128xf32> to vector<16x128xf32>
    %12 = vector.shape_cast %9 : vector<16x128xf32> to vector<1x16x128xf32>
    tpu.vector_store %arg5[%c0_12, %c0_13, %c0_14], %12 {strides = array<i32>} : memref<1x16x128xf32, #tpu.memory_space<vmem>>, vector<1x16x128xf32>,
    return
  }
  func.func @transform_0(%arg0: i32, %arg1: i32) -> (i32, i32, i32) {
    %c0_i32 = arith.constant 0 : i32
    %c0_i32_0 = arith.constant 0 : i32
    return %arg0, %c0_i32, %arg1 : i32, i32, i32
  }
  func.func @transform_1(%arg0: i32, %arg1: i32) -> (i32, i32) {
    %c0_i32 = arith.constant 0 : i32
    %c0_i32_0 = arith.constant 0 : i32
    %c0_i32_1 = arith.constant 0 : i32
    return %c0_i32, %c0_i32_0 : i32, i32
  }
  func.func @transform_2(%arg0: i32, %arg1: i32) -> (i32, i32) {
    %c0_i32 = arith.constant 0 : i32
    %c0_i32_0 = arith.constant 0 : i32
    %c0_i32_1 = arith.constant 0 : i32
    return %c0_i32, %c0_i32_0 : i32, i32
  }
  func.func @transform_3(%arg0: i32, %arg1: i32) -> (i32, i32, i32) {
    %c0_i32 = arith.constant 0 : i32
    %c0_i32_0 = arith.constant 0 : i32
    return %arg0, %c0_i32, %arg1 : i32, i32, i32
  }
}

module attributes {stable_mosaic.version = 11 : i64} {
  func.func @_spa_kernel(%arg0: i32, %arg1: i32, %arg2: memref<1x1x16x504xf32, #tpu.memory_space<vmem>>, %arg3: memref<9x4x16xf32, #tpu.memory_space<vmem>>, %arg4: memref<1x4x384xf32, #tpu.memory_space<vmem>>) attributes {dimension_semantics = [#tpu.dimension_semantics<parallel>, #tpu.dimension_semantics<parallel>], iteration_bounds = array<i64: 2, 2>, scalar_prefetch = 0 : i64, scratch_operands = 0 : i64, tpu.core_type = #tpu.core_type<tc>, window_params = [{transform_indices = @transform_0, window_bounds = array<i64: 1, 1, 16, 504>}, {pipeline_mode = #tpu.pipeline_mode<synchronous>, transform_indices = @transform_1, window_bounds = array<i64: 9, 4, 16>}, {transform_indices = @transform_2, window_bounds = array<i64: 1, 4, 384>}]} {
    %c0 = arith.constant 0 : index
    %c0_0 = arith.constant 0 : index
    %c0_1 = arith.constant 0 : index
    %0 = vector.load %arg3[%c0, %c0_0, %c0_1] : memref<9x4x16xf32, #tpu.memory_space<vmem>>, vector<1x4x16xf32>
    %1 = vector.shape_cast %0 : vector<1x4x16xf32> to vector<4x16xf32>
    %c0_2 = arith.constant 0 : index
    %c0_3 = arith.constant 0 : index
    %c0_4 = arith.constant 0 : index
    %c0_5 = arith.constant 0 : index
    %2 = vector.load %arg2[%c0_2, %c0_3, %c0_4, %c0_5] : memref<1x1x16x504xf32, #tpu.memory_space<vmem>>, vector<1x1x16x384xf32>
    %3 = vector.shape_cast %2 : vector<1x1x16x384xf32> to vector<16x384xf32>
    %cst = arith.constant dense<0.000000e+00> : vector<4x384xf32>
    %4 = tpu.matmul %1, %3, %cst {dimension_numbers = #tpu.dot_dimension_numbers<[1], [0], [0], [1], [0, 0, 1, 1], [], []>} : vector<4x16xf32>, vector<16x384xf32>, vector<4x384xf32> -> vector<4x384xf32>
    %c1 = arith.constant 1 : index
    %c0_6 = arith.constant 0 : index
    %c0_7 = arith.constant 0 : index
    %5 = vector.load %arg3[%c1, %c0_6, %c0_7] : memref<9x4x16xf32, #tpu.memory_space<vmem>>, vector<1x4x16xf32>
    %6 = vector.shape_cast %5 : vector<1x4x16xf32> to vector<4x16xf32>
    %c0_8 = arith.constant 0 : index
    %c0_9 = arith.constant 0 : index
    %c0_10 = arith.constant 0 : index
    %c2 = arith.constant 2 : index
    %7 = vector.load %arg2[%c0_8, %c0_9, %c0_10, %c2] : memref<1x1x16x504xf32, #tpu.memory_space<vmem>>, vector<1x1x16x384xf32>
    %8 = vector.shape_cast %7 : vector<1x1x16x384xf32> to vector<16x384xf32>
    %cst_11 = arith.constant dense<0.000000e+00> : vector<4x384xf32>
    %9 = tpu.matmul %6, %8, %cst_11 {dimension_numbers = #tpu.dot_dimension_numbers<[1], [0], [0], [1], [0, 0, 1, 1], [], []>} : vector<4x16xf32>, vector<16x384xf32>, vector<4x384xf32> -> vector<4x384xf32>
    %10 = arith.addf %4, %9 : vector<4x384xf32>
    %c2_12 = arith.constant 2 : index
    %c0_13 = arith.constant 0 : index
    %c0_14 = arith.constant 0 : index
    %11 = vector.load %arg3[%c2_12, %c0_13, %c0_14] : memref<9x4x16xf32, #tpu.memory_space<vmem>>, vector<1x4x16xf32>
    %12 = vector.shape_cast %11 : vector<1x4x16xf32> to vector<4x16xf32>
    %c0_15 = arith.constant 0 : index
    %c0_16 = arith.constant 0 : index
    %c0_17 = arith.constant 0 : index
    %c4 = arith.constant 4 : index
    %13 = vector.load %arg2[%c0_15, %c0_16, %c0_17, %c4] : memref<1x1x16x504xf32, #tpu.memory_space<vmem>>, vector<1x1x16x384xf32>
    %14 = vector.shape_cast %13 : vector<1x1x16x384xf32> to vector<16x384xf32>
    %cst_18 = arith.constant dense<0.000000e+00> : vector<4x384xf32>
    %15 = tpu.matmul %12, %14, %cst_18 {dimension_numbers = #tpu.dot_dimension_numbers<[1], [0], [0], [1], [0, 0, 1, 1], [], []>} : vector<4x16xf32>, vector<16x384xf32>, vector<4x384xf32> -> vector<4x384xf32>
    %16 = arith.addf %10, %15 : vector<4x384xf32>
    %c3 = arith.constant 3 : index
    %c0_19 = arith.constant 0 : index
    %c0_20 = arith.constant 0 : index
    %17 = vector.load %arg3[%c3, %c0_19, %c0_20] : memref<9x4x16xf32, #tpu.memory_space<vmem>>, vector<1x4x16xf32>
    %18 = vector.shape_cast %17 : vector<1x4x16xf32> to vector<4x16xf32>
    %c0_21 = arith.constant 0 : index
    %c0_22 = arith.constant 0 : index
    %c0_23 = arith.constant 0 : index
    %c48 = arith.constant 48 : index
    %19 = vector.load %arg2[%c0_21, %c0_22, %c0_23, %c48] : memref<1x1x16x504xf32, #tpu.memory_space<vmem>>, vector<1x1x16x384xf32>
    %20 = vector.shape_cast %19 : vector<1x1x16x384xf32> to vector<16x384xf32>
    %cst_24 = arith.constant dense<0.000000e+00> : vector<4x384xf32>
    %21 = tpu.matmul %18, %20, %cst_24 {dimension_numbers = #tpu.dot_dimension_numbers<[1], [0], [0], [1], [0, 0, 1, 1], [], []>} : vector<4x16xf32>, vector<16x384xf32>, vector<4x384xf32> -> vector<4x384xf32>
    %22 = arith.addf %16, %21 : vector<4x384xf32>
    %c4_25 = arith.constant 4 : index
    %c0_26 = arith.constant 0 : index
    %c0_27 = arith.constant 0 : index
    %23 = vector.load %arg3[%c4_25, %c0_26, %c0_27] : memref<9x4x16xf32, #tpu.memory_space<vmem>>, vector<1x4x16xf32>
    %24 = vector.shape_cast %23 : vector<1x4x16xf32> to vector<4x16xf32>
    %c0_28 = arith.constant 0 : index
    %c0_29 = arith.constant 0 : index
    %c0_30 = arith.constant 0 : index
    %c50 = arith.constant 50 : index
    %25 = vector.load %arg2[%c0_28, %c0_29, %c0_30, %c50] : memref<1x1x16x504xf32, #tpu.memory_space<vmem>>, vector<1x1x16x384xf32>
    %26 = vector.shape_cast %25 : vector<1x1x16x384xf32> to vector<16x384xf32>
    %cst_31 = arith.constant dense<0.000000e+00> : vector<4x384xf32>
    %27 = tpu.matmul %24, %26, %cst_31 {dimension_numbers = #tpu.dot_dimension_numbers<[1], [0], [0], [1], [0, 0, 1, 1], [], []>} : vector<4x16xf32>, vector<16x384xf32>, vector<4x384xf32> -> vector<4x384xf32>
    %28 = arith.addf %22, %27 : vector<4x384xf32>
    %c5 = arith.constant 5 : index
    %c0_32 = arith.constant 0 : index
    %c0_33 = arith.constant 0 : index
    %29 = vector.load %arg3[%c5, %c0_32, %c0_33] : memref<9x4x16xf32, #tpu.memory_space<vmem>>, vector<1x4x16xf32>
    %30 = vector.shape_cast %29 : vector<1x4x16xf32> to vector<4x16xf32>
    %c0_34 = arith.constant 0 : index
    %c0_35 = arith.constant 0 : index
    %c0_36 = arith.constant 0 : index
    %c52 = arith.constant 52 : index
    %31 = vector.load %arg2[%c0_34, %c0_35, %c0_36, %c52] : memref<1x1x16x504xf32, #tpu.memory_space<vmem>>, vector<1x1x16x384xf32>
    %32 = vector.shape_cast %31 : vector<1x1x16x384xf32> to vector<16x384xf32>
    %cst_37 = arith.constant dense<0.000000e+00> : vector<4x384xf32>
    %33 = tpu.matmul %30, %32, %cst_37 {dimension_numbers = #tpu.dot_dimension_numbers<[1], [0], [0], [1], [0, 0, 1, 1], [], []>} : vector<4x16xf32>, vector<16x384xf32>, vector<4x384xf32> -> vector<4x384xf32>
    %34 = arith.addf %28, %33 : vector<4x384xf32>
    %c6 = arith.constant 6 : index
    %c0_38 = arith.constant 0 : index
    %c0_39 = arith.constant 0 : index
    %35 = vector.load %arg3[%c6, %c0_38, %c0_39] : memref<9x4x16xf32, #tpu.memory_space<vmem>>, vector<1x4x16xf32>
    %36 = vector.shape_cast %35 : vector<1x4x16xf32> to vector<4x16xf32>
    %c0_40 = arith.constant 0 : index
    %c0_41 = arith.constant 0 : index
    %c0_42 = arith.constant 0 : index
    %c96 = arith.constant 96 : index
    %37 = vector.load %arg2[%c0_40, %c0_41, %c0_42, %c96] : memref<1x1x16x504xf32, #tpu.memory_space<vmem>>, vector<1x1x16x384xf32>
    %38 = vector.shape_cast %37 : vector<1x1x16x384xf32> to vector<16x384xf32>
    %cst_43 = arith.constant dense<0.000000e+00> : vector<4x384xf32>
    %39 = tpu.matmul %36, %38, %cst_43 {dimension_numbers = #tpu.dot_dimension_numbers<[1], [0], [0], [1], [0, 0, 1, 1], [], []>} : vector<4x16xf32>, vector<16x384xf32>, vector<4x384xf32> -> vector<4x384xf32>
    %40 = arith.addf %34, %39 : vector<4x384xf32>
    %c7 = arith.constant 7 : index
    %c0_44 = arith.constant 0 : index
    %c0_45 = arith.constant 0 : index
    %41 = vector.load %arg3[%c7, %c0_44, %c0_45] : memref<9x4x16xf32, #tpu.memory_space<vmem>>, vector<1x4x16xf32>
    %42 = vector.shape_cast %41 : vector<1x4x16xf32> to vector<4x16xf32>
    %c0_46 = arith.constant 0 : index
    %c0_47 = arith.constant 0 : index
    %c0_48 = arith.constant 0 : index
    %c98 = arith.constant 98 : index
    %43 = vector.load %arg2[%c0_46, %c0_47, %c0_48, %c98] : memref<1x1x16x504xf32, #tpu.memory_space<vmem>>, vector<1x1x16x384xf32>
    %44 = vector.shape_cast %43 : vector<1x1x16x384xf32> to vector<16x384xf32>
    %cst_49 = arith.constant dense<0.000000e+00> : vector<4x384xf32>
    %45 = tpu.matmul %42, %44, %cst_49 {dimension_numbers = #tpu.dot_dimension_numbers<[1], [0], [0], [1], [0, 0, 1, 1], [], []>} : vector<4x16xf32>, vector<16x384xf32>, vector<4x384xf32> -> vector<4x384xf32>
    %46 = arith.addf %40, %45 : vector<4x384xf32>
    %c8 = arith.constant 8 : index
    %c0_50 = arith.constant 0 : index
    %c0_51 = arith.constant 0 : index
    %47 = vector.load %arg3[%c8, %c0_50, %c0_51] : memref<9x4x16xf32, #tpu.memory_space<vmem>>, vector<1x4x16xf32>
    %48 = vector.shape_cast %47 : vector<1x4x16xf32> to vector<4x16xf32>
    %c0_52 = arith.constant 0 : index
    %c0_53 = arith.constant 0 : index
    %c0_54 = arith.constant 0 : index
    %c100 = arith.constant 100 : index
    %49 = vector.load %arg2[%c0_52, %c0_53, %c0_54, %c100] : memref<1x1x16x504xf32, #tpu.memory_space<vmem>>, vector<1x1x16x384xf32>
    %50 = vector.shape_cast %49 : vector<1x1x16x384xf32> to vector<16x384xf32>
    %cst_55 = arith.constant dense<0.000000e+00> : vector<4x384xf32>
    %51 = tpu.matmul %48, %50, %cst_55 {dimension_numbers = #tpu.dot_dimension_numbers<[1], [0], [0], [1], [0, 0, 1, 1], [], []>} : vector<4x16xf32>, vector<16x384xf32>, vector<4x384xf32> -> vector<4x384xf32>
    %52 = arith.addf %46, %51 : vector<4x384xf32>
    %cst_56 = arith.constant 0.000000e+00 : f32
    %53 = vector.broadcast %cst_56 : f32 to vector<4x384xf32>
    %54 = arith.maximumf %52, %53 : vector<4x384xf32>
    %c0_57 = arith.constant 0 : index
    %c0_58 = arith.constant 0 : index
    %c0_59 = arith.constant 0 : index
    %55 = vector.load %arg4[%c0_57, %c0_58, %c0_59] : memref<1x4x384xf32, #tpu.memory_space<vmem>>, vector<1x4x384xf32>
    %56 = vector.shape_cast %55 : vector<1x4x384xf32> to vector<4x384xf32>
    %57 = vector.shape_cast %54 : vector<4x384xf32> to vector<1x4x384xf32>
    tpu.vector_store %arg4[%c0_57, %c0_58, %c0_59], %57 {strides = array<i32>} : memref<1x4x384xf32, #tpu.memory_space<vmem>>, vector<1x4x384xf32>,
    return
  }
  func.func @transform_0(%arg0: i32, %arg1: i32) -> (i32, i32, i32, i32) {
    %c0_i32 = arith.constant 0 : i32
    %c0_i32_0 = arith.constant 0 : i32
    %c0_i32_1 = arith.constant 0 : i32
    return %arg0, %arg1, %c0_i32, %c0_i32_0 : i32, i32, i32, i32
  }
  func.func @transform_1(%arg0: i32, %arg1: i32) -> (i32, i32, i32) {
    %c0_i32 = arith.constant 0 : i32
    %c0_i32_0 = arith.constant 0 : i32
    %c0_i32_1 = arith.constant 0 : i32
    %c0_i32_2 = arith.constant 0 : i32
    return %c0_i32, %c0_i32_0, %c0_i32_1 : i32, i32, i32
  }
  func.func @transform_2(%arg0: i32, %arg1: i32) -> (i32, i32, i32) {
    %c0_i32 = arith.constant 0 : i32
    %c0_i32_0 = arith.constant 0 : i32
    return %arg0, %c0_i32, %arg1 : i32, i32, i32
  }
}

</mosaic_0001>

<llo_original>
// kernel: _lambda_.2
$region0: #{_lambda_.2}
  #allocation0 [shape = 'u32[]', space=smem, size = 0x4, offset = 0x4, fixed_abs, tag = 'smem constant byte address 0x4 - core index']
  #allocation1 [shape = 'u32[144,128]{1,0:T(1,128)}', space=vmem, size = 0x12000, scoped, tag = 'internal scratch']
  #allocation2 [shape = 'f32[4,128]{1,0:T(4,128)}', space=vmem, size = 0x800, scoped, tag = 'scratch operand']
  %s0 = inlined_call_operand.vmem [shape: f32[2,12,256], index: 0, kind: input, shape index: {}]
  %s1 = inlined_call_operand.vmem [shape: f32[4,12], index: 1, kind: input, shape index: {}]
  %s2 = inlined_call_operand.vmem [shape: f32[16,4], index: 2, kind: input, shape index: {}]
  %s3 = inlined_call_operand.vmem [shape: f32[2,16,256], index: 3, kind: output, shape index: {}]
  %s4 = sld [smem:[#allocation0]]
  $region117: #{_lambda_.2} parent=0
    _
  %s6 = ssub.s32 1, %s4
  %s7 = scalar_select 0, %s6, %s4
  $region1: #{_lambda_.2} parent=0
    #allocation3 [shape = 'u8[16384]{0}', space=vmem, size = 0x4000, scoped, tag = 'input window, operand 0']
    #allocation4 [shape = 'u8[16384]{0}', space=vmem, size = 0x4000, scoped, tag = 'output window, operand 0']
    loop: start=0, step=1, limit=6
    $region2: #{_lambda_.2} parent=1 // loop_pre_header
      _
    $region3: #{_lambda_.2} parent=1 // loop_header
      %s9 = sphi 0, %s13
      %p10 = scmp.ge.s32.totalorder %s9, 6
      %s16 = sphi 0, %s28
      %s17 = sphi 0, %s24
      %s18 = sphi 0, %s16
      %s19 = sphi 0, %s17
      %s20 = sphi 0, %s18
      %s21 = sphi 0, %s19
      %s33 = sphi 0, %s35
      %s36 = sphi 0, %s33
      %s37 = sphi 0, %s36
      %s53 = sphi 0, %s37
      %s57 = sphi 0, %s57
      %s59 = sphi 0, %s57
      %s60 = sphi 0, %s59
      %s74 = sphi 0, %s60
      %s78 = sphi 0, %s78
      %s80 = sphi 0, %s78
      %s81 = sphi 0, %s80
      %s95 = sphi 0, %s81
      %s103 = sphi 0, %s105
      %s106 = sphi 0, %s103
      %s107 = sphi 0, %s106
      %s123 = sphi 0, %s107
    $region4: #{_lambda_.2} parent=1 // loop_header_branch
      %12 = sbr.rel (%p10) target = $region8
    $region5: #{_lambda_.2} parent=1 // loop_body
      %s14 = ssub.s32 %s9, 1
      %s15 = ssub.s32 %s9, 2
      %s22 = sadd.s32 1, %s17
      %p23 = scmp.ge.s32.totalorder %s22, 2
      %s24 = scalar_select %p23, 0, %s22
      %s25 = sadd.s32 1, %s16
      %s26 = scalar_select %p23, %s25, %s16
      %p27 = scmp.ge.s32.totalorder %s26, 2
      %s28 = scalar_select %p27, 0, %s26
      %s29 = ssub.s32 %s16, %s28
      %s30 = ssub.s32 %s17, %s24
      %s31 = sor.u32 %s29, %s30
      %p32 = scmp.eq.s32.totalorder %s31, 0
      %s34 = sadd.s32 %s33, 1
      %s35 = scalar_select %p32, %s33, %s34
      %p38 = pneg %p32
      %p39 = scmp.eq.s32.totalorder %s9, 3
      %p40 = por %p38, %p39
      %p41 = scmp.ne.s32.totalorder %s33, %s36
      %p42 = scmp.eq.s32.totalorder %s9, 0
      %p43 = por %p41, %p42
      %p44 = scmp.ne.s32.totalorder %s33, %s36
      %p45 = scmp.eq.s32.totalorder %s14, 3
      %p46 = por %p44, %p45
      %p47 = scmp.ne.s32.totalorder %s36, %s37
      %p48 = scmp.eq.s32.totalorder %s14, 0
      %p49 = por %p47, %p48
      %p50 = scmp.ne.s32.totalorder %s36, %s37
      %p51 = scmp.eq.s32.totalorder %s15, 3
      %p52 = por %p50, %p51
      %p54 = scmp.ne.s32.totalorder %s37, %s53
      %p55 = scmp.eq.s32.totalorder %s15, 0
      %p56 = por %p54, %p55
      %s58 = sadd.s32 %s57, 1
      %p61 = scmp.eq.s32.totalorder %s9, 3
      %p62 = scmp.ne.s32.totalorder %s57, %s59
      %p63 = scmp.eq.s32.totalorder %s9, 0
      %p64 = por %p62, %p63
      %p65 = scmp.ne.s32.totalorder %s57, %s59
      %p66 = scmp.eq.s32.totalorder %s14, 3
      %p67 = por %p65, %p66
      %p68 = scmp.ne.s32.totalorder %s59, %s60
      %p69 = scmp.eq.s32.totalorder %s14, 0
      %p70 = por %p68, %p69
      %p71 = scmp.ne.s32.totalorder %s59, %s60
      %p72 = scmp.eq.s32.totalorder %s15, 3
      %p73 = por %p71, %p72
      %p75 = scmp.ne.s32.totalorder %s60, %s74
      %p76 = scmp.eq.s32.totalorder %s15, 0
      %p77 = por %p75, %p76
      %s79 = sadd.s32 %s78, 1
      %p82 = scmp.eq.s32.totalorder %s9, 3
      %p83 = scmp.ne.s32.totalorder %s78, %s80
      %p84 = scmp.eq.s32.totalorder %s9, 0
      %p85 = por %p83, %p84
      %p86 = scmp.ne.s32.totalorder %s78, %s80
      %p87 = scmp.eq.s32.totalorder %s14, 3
      %p88 = por %p86, %p87
      %p89 = scmp.ne.s32.totalorder %s80, %s81
      %p90 = scmp.eq.s32.totalorder %s14, 0
      %p91 = por %p89, %p90
      %p92 = scmp.ne.s32.totalorder %s80, %s81
      %p93 = scmp.eq.s32.totalorder %s15, 3
      %p94 = por %p92, %p93
      %p96 = scmp.ne.s32.totalorder %s81, %s95
      %p97 = scmp.eq.s32.totalorder %s15, 0
      %p98 = por %p96, %p97
      %s99 = ssub.s32 %s16, %s28
      %s100 = ssub.s32 %s17, %s24
      %s101 = sor.u32 %s99, %s100
      %p102 = scmp.eq.s32.totalorder %s101, 0
      %s104 = sadd.s32 %s103, 1
      %s105 = scalar_select %p102, %s103, %s104
      %p108 = pneg %p102
      %p109 = scmp.eq.s32.totalorder %s9, 3
      %p110 = por %p108, %p109
      %p111 = scmp.ne.s32.totalorder %s103, %s106
      %p112 = scmp.eq.s32.totalorder %s9, 0
      %p113 = por %p111, %p112
      %p114 = scmp.ne.s32.totalorder %s103, %s106
      %p115 = scmp.eq.s32.totalorder %s14, 3
      %p116 = por %p114, %p115
      %p117 = scmp.ne.s32.totalorder %s106, %s107
      %p118 = scmp.eq.s32.totalorder %s14, 0
      %p119 = por %p117, %p118
      %p120 = scmp.ne.s32.totalorder %s106, %s107
      %p121 = scmp.eq.s32.totalorder %s15, 3
      %p122 = por %p120, %p121
      %p124 = scmp.ne.s32.totalorder %s107, %s123
      %p125 = scmp.eq.s32.totalorder %s15, 0
      %p126 = por %p124, %p125
      %p127 = scmp.le.s32.totalorder 1, %s9
      %p128 = scmp.lt.s32.totalorder %s9, 5
      %p129 = pnand %p127, %p128
      %p130 = pneg %p129
      // Predicated region
      $region9: #{_lambda_.2} parent=5 // pred_check
        _
      $region10: #{_lambda_.2} parent=5 // pred_check_branch
        %132 = sbr.rel (%p129) target = $region12
      $region11: #{_lambda_.2} parent=5 // pred_region
        %s133 = ssub.s32 %s9, 1
        // Predicated region
        $region13: #{_lambda_.2} parent=11 // pred_check
          %p134 = pneg %p70
        $region14: #{_lambda_.2} parent=11 // pred_check_branch
          %136 = sbr.rel (%p134) target = $region16
        $region15: #{_lambda_.2} parent=11 // pred_region
          _
        $region16: #{_lambda_.2} parent=11 // pred_fallthru
          _
        // Predicated region
        $region17: #{_lambda_.2} parent=11 // pred_check
          %p137 = pneg %p91
        $region18: #{_lambda_.2} parent=11 // pred_check_branch
          %139 = sbr.rel (%p137) target = $region20
        $region19: #{_lambda_.2} parent=11 // pred_region
          _
        $region20: #{_lambda_.2} parent=11 // pred_fallthru
          _
      $region12: #{_lambda_.2} parent=5 // pred_fallthru
        _
      %p140 = scmp.lt.s32.totalorder %s9, 4
      // Predicated region
      $region21: #{_lambda_.2} parent=5 // pred_check
        %p141 = pneg %p140
      $region22: #{_lambda_.2} parent=5 // pred_check_branch
        %143 = sbr.rel (%p141) target = $region24
      $region23: #{_lambda_.2} parent=5 // pred_region
        // Predicated region
        $region25: #{_lambda_.2} parent=23 // pred_check
          %p144 = pneg %p43
        $region26: #{_lambda_.2} parent=23 // pred_check_branch
          %146 = sbr.rel (%p144) target = $region28
        $region27: #{_lambda_.2} parent=23 // pred_region
          %s147 = sand.u32 %s33, 1
          %s148 = sand.u32 %s33, 1
          %s149 = smul.addr %s148, 16
          %s150 = scalar_lea.vmem [#allocation3], %s149
          %s151 = smul.addr %s16, 4
          %s152 = sadd.s32 %s17, %s151
          %s153 = smul.addr %s152, 8
          %s154 = scalar_lea.vmem %s0, %s153
          // Predicated region
          $region29: #{_lambda_.2} parent=27 // pred_check
            _
          $region30: #{_lambda_.2} parent=27 // pred_check_branch
            %156 = sbr.rel (0) target = $region32
          $region31: #{_lambda_.2} parent=27 // pred_region
            // Predicated region
            $region33: #{_lambda_.2} parent=31 // pred_check
              _
            $region34: #{_lambda_.2} parent=31 // pred_check_branch
              %158 = sbr.rel (0) target = $region36
            $region35: #{_lambda_.2} parent=31 // pred_region
              // Predicated region
              $region48: #{_lambda_.2} parent=35 // pred_check
                _
              $region49: #{_lambda_.2} parent=35 // pred_check_branch
                %175 = sbr.rel (0) target = $region51
              $region50: #{_lambda_.2} parent=35 // pred_region
                loop: start=0, step=1, limit=1
                $region52: #{_lambda_.2} parent=50 // loop_pre_header
                  _
                $region53: #{_lambda_.2} parent=50 // loop_header
                  %s177 = sphi 0, %s181
                  %p178 = scmp.ge.s32.totalorder %s177, 1
                  %s182 = sphi %s154, %s154
                  %s183 = sphi %s150, %s150
                $region54: #{_lambda_.2} parent=50 // loop_header_branch
                  %180 = sbr.rel (%p178) target = $region58
                $region55: #{_lambda_.2} parent=50 // loop_body
                  %v184 = vld [vmem:[%s182] sm:$0xff]
                  %185 = vst [vmem:[%s183] sm:$0xff] %v184
                  %v186 = vld [vmem:[%s182 + $0x10] sm:$0xff]
                  %187 = vst [vmem:[%s183 + $0x8] sm:$0xff] %v186
                $region56: #{_lambda_.2} parent=50 // loop_footer
                  %s181 = sadd.s32 1, %s177
                $region57: #{_lambda_.2} parent=50 // loop_footer_branch
                  %176 = sbr.rel target = $region53
                $region58: #{_lambda_.2} parent=50 // loop_exit
                  _
              $region51: #{_lambda_.2} parent=35 // pred_fallthru
                _
              // Predicated region
              $region59: #{_lambda_.2} parent=35 // pred_check
                _
              $region60: #{_lambda_.2} parent=35 // pred_check_branch
                %189 = sbr.rel target = $region62
              $region61: #{_lambda_.2} parent=35 // pred_region
                _
              $region62: #{_lambda_.2} parent=35 // pred_fallthru
                _
            $region36: #{_lambda_.2} parent=31 // pred_fallthru
              _
            // Predicated region
            $region37: #{_lambda_.2} parent=31 // pred_check
              _
            $region38: #{_lambda_.2} parent=31 // pred_check_branch
              %160 = sbr.rel target = $region40
            $region39: #{_lambda_.2} parent=31 // pred_region
              loop: start=0, step=1, limit=1
              $region41: #{_lambda_.2} parent=39 // loop_pre_header
                _
              $region42: #{_lambda_.2} parent=39 // loop_header
                %s163 = sphi 0, %s167
                %p164 = scmp.ge.s32.totalorder %s163, 1
                %s168 = sphi %s154, %s154
                %s169 = sphi %s150, %s150
              $region43: #{_lambda_.2} parent=39 // loop_header_branch
                %166 = sbr.rel (%p164) target = $region47
              $region44: #{_lambda_.2} parent=39 // loop_body
                %v170 = vld [vmem:[%s168] sm:$0xff]
                %171 = vst [vmem:[%s169] sm:$0xff] %v170
                %v172 = vld [vmem:[%s168 + $0x10] sm:$0xff]
                %173 = vst [vmem:[%s169 + $0x8] sm:$0xff] %v172
              $region45: #{_lambda_.2} parent=39 // loop_footer
                %s167 = sadd.s32 1, %s163
              $region46: #{_lambda_.2} parent=39 // loop_footer_branch
                %162 = sbr.rel target = $region42
              $region47: #{_lambda_.2} parent=39 // loop_exit
                _
            $region40: #{_lambda_.2} parent=31 // pred_fallthru
              _
          $region32: #{_lambda_.2} parent=27 // pred_fallthru
            _
          %190 = vnop
        $region28: #{_lambda_.2} parent=23 // pred_fallthru
          _
      $region24: #{_lambda_.2} parent=5 // pred_fallthru
        _
      %p191 = scmp.le.s32.totalorder 1, %s9
      %p192 = scmp.lt.s32.totalorder %s9, 5
      %p193 = pnand %p191, %p192
      %p194 = pneg %p193
      // Predicated region
      $region63: #{_lambda_.2} parent=5 // pred_check
        _
      $region64: #{_lambda_.2} parent=5 // pred_check_branch
        %196 = sbr.rel (%p193) target = $region66
      $region65: #{_lambda_.2} parent=5 // pred_region
        %s197 = ssub.s32 %s9, 1
        %s198 = sand.u32 %s36, 1
        %s199 = sand.u32 %s36, 1
        %s200 = smul.addr %s199, 16
        %s201 = scalar_lea.vmem [#allocation3], %s200
        // Predicated region
        $region67: #{_lambda_.2} parent=65 // pred_check
          %p202 = pneg %p49
        $region68: #{_lambda_.2} parent=65 // pred_check_branch
          %204 = sbr.rel (%p202) target = $region70
        $region69: #{_lambda_.2} parent=65 // pred_region
          _
        $region70: #{_lambda_.2} parent=65 // pred_fallthru
          _
        %s205 = sand.u32 %s36, 1
        %s206 = sand.u32 %s36, 1
        %s207 = smul.addr %s206, 16
        %s208 = scalar_lea.vmem [#allocation3], %s207
        %p209 = pneg %p49
        %p210 = pneg %p46
        %p211 = pneg %p70
        %p212 = pneg %p67
        %p213 = pneg %p91
        %p214 = pneg %p88
        %p215 = pneg %p119
        %p216 = pneg %p116
        %s217 = sand.u32 %s106, 1
        %s218 = sand.u32 %s106, 1
        %s219 = smul.addr %s218, 16
        %s220 = scalar_lea.vmem [#allocation4], %s219
        %v221 = vld [vmem:[%s1] sm:$0xf]
        %v222 = vld [vmem:[%s201] sm:$0xff]
        %v223 = vld [vmem:[%s201 + $0x8] sm:$0xf]
        %vm224 = vcmask 97280
        %v226 = vsel %vm224, %v221, 0
        %vm228 = vcmask 1043456
        %v230 = vsel %vm228, %v223, 0
        %232 = vmatprep.subr.mxu0 0.0
        %233 = vmatpush1.msra.mxu0 %v222
        %234 = vmatprep.subr.mxu0 0.0
        %235 = vmatpush1.msra.mxu0 %v230
        %236 = vmatprep.subr.mxu0 0.0
        %237 = vmatpush1.msra.mxu0 0.0
        %238 = vmatprep.subr.mxu0 0.0
        %239 = vmatpush1.msra.mxu0 0.0
        %240 = vmatprep.subr.mxu0 0.0
        %241 = vmatpush1.msra.mxu0 0.0
        %242 = vmatprep.subr.mxu0 0.0
        %243 = vmatpush1.msra.mxu0 0.0
        %244 = vmatprep.subr.mxu0 0.0
        %245 = vmatpush1.msra.mxu0 0.0
        %246 = vmatprep.subr.mxu0 0.0
        %247 = vmatpush1.msra.mxu0 0.0
        %248 = vmatprep.subr.mxu0 0.0
        %249 = vmatpush1.msra.mxu0 0.0
        %250 = vmatprep.subr.mxu0 0.0
        %251 = vmatpush1.msra.mxu0 0.0
        %252 = vmatprep.subr.mxu0 0.0
        %253 = vmatpush1.msra.mxu0 0.0
        %254 = vmatprep.subr.mxu0 0.0
        %255 = vmatpush1.msra.mxu0 0.0
        %256 = vmatprep.subr.mxu0 0.0
        %257 = vmatpush1.msra.mxu0 0.0
        %258 = vmatprep.subr.mxu0 0.0
        %259 = vmatpush1.msra.mxu0 0.0
        %260 = vmatprep.subr.mxu0 0.0
        %261 = vmatpush1.msra.mxu0 0.0
        %262 = vmatprep.subr.mxu0 0.0
        %263 = vmatpush1.msra.mxu0 0.0
        %264 = vmatprep.subr.mxu0 0.0
        %265 = vmatpush1.msra.mxu0 0.0
        %266 = vmatprep.subr.mxu0 0.0
        %267 = vmatpush1.msra.mxu0 0.0
        %268 = vmatprep.subr.mxu0 0.0
        %269 = vmatpush1.msra.mxu0 0.0
        %270 = vmatprep.subr.mxu0 0.0
        %271 = vmatpush1.msra.mxu0 0.0
        %272 = vmatprep.subr.mxu0 0.0
        %273 = vmatpush1.msra.mxu0 0.0
        %274 = vmatprep.subr.mxu0 0.0
        %275 = vmatpush1.msra.mxu0 0.0
        %276 = vmatprep.subr.mxu0 0.0
        %277 = vmatpush1.msra.mxu0 0.0
        %278 = vmatprep.subr.mxu0 0.0
        %279 = vmatpush1.msra.mxu0 0.0
        %280 = vmatprep.subr.mxu0 0.0
        %281 = vmatpush1.msra.mxu0 0.0
        %282 = vmatprep.subr.mxu0 0.0
        %283 = vmatpush1.msra.mxu0 0.0
        %284 = vmatprep.subr.mxu0 0.0
        %285 = vmatpush1.msra.mxu0 0.0
        %286 = vmatprep.subr.mxu0 0.0
        %287 = vmatpush1.msra.mxu0 0.0
        %288 = vmatprep.subr.mxu0 0.0
        %289 = vmatpush1.msra.mxu0 0.0
        %290 = vmatprep.subr.mxu0 0.0
        %291 = vmatpush1.msra.mxu0 0.0
        %292 = vmatprep.subr.mxu0 0.0
        %293 = vmatpush1.msra.mxu0 0.0
        %294 = vmatprep.subr.mxu0 0.0
        %295 = vmatpush1.msra.mxu0 0.0
        %296 = vmatprep.mubr.f32.mxu0 0.0
        %297 = vmatmul.mubr.f32.gmra.mrb[0].mxu0 %v226
        %v298 = vpop.f32.mrb[0].mxu0
        %v299 = vadd.f32 0.0, %v298
        %v300 = vpop.f32.mrb[0].mxu0
        %301 = vdwg.mxu0
        %v302 = vmax.f32 %v299, 0.0
        %303 = vst [vmem:[#allocation2] sm:$0xf] %v302
        %v304 = vld [vmem:[%s2] sm:$0xff]
        %v305 = vld [vmem:[%s2 + $0x8] sm:$0xff]
        %v306 = vld [vmem:[#allocation2] sm:$0xf]
        %vm307 = vcmask 31744
        %v309 = vsel %vm307, %v304, 0
        %v312 = vsel %vm307, %v305, 0
        %v315 = vsel %vm228, %v306, 0
        %317 = vmatprep.subr.mxu0 0.0
        %318 = vmatpush1.msra.mxu0 %v315
        %319 = vmatprep.subr.mxu0 0.0
        %320 = vmatpush1.msra.mxu0 0.0
        %321 = vmatprep.subr.mxu0 0.0
        %322 = vmatpush1.msra.mxu0 0.0
        %323 = vmatprep.subr.mxu0 0.0
        %324 = vmatpush1.msra.mxu0 0.0
        %325 = vmatprep.subr.mxu0 0.0
        %326 = vmatpush1.msra.mxu0 0.0
        %327 = vmatprep.subr.mxu0 0.0
        %328 = vmatpush1.msra.mxu0 0.0
        %329 = vmatprep.subr.mxu0 0.0
        %330 = vmatpush1.msra.mxu0 0.0
        %331 = vmatprep.subr.mxu0 0.0
        %332 = vmatpush1.msra.mxu0 0.0
        %333 = vmatprep.subr.mxu0 0.0
        %334 = vmatpush1.msra.mxu0 0.0
        %335 = vmatprep.subr.mxu0 0.0
        %336 = vmatpush1.msra.mxu0 0.0
        %337 = vmatprep.subr.mxu0 0.0
        %338 = vmatpush1.msra.mxu0 0.0
        %339 = vmatprep.subr.mxu0 0.0
        %340 = vmatpush1.msra.mxu0 0.0
        %341 = vmatprep.subr.mxu0 0.0
        %342 = vmatpush1.msra.mxu0 0.0
        %343 = vmatprep.subr.mxu0 0.0
        %344 = vmatpush1.msra.mxu0 0.0
        %345 = vmatprep.subr.mxu0 0.0
        %346 = vmatpush1.msra.mxu0 0.0
        %347 = vmatprep.subr.mxu0 0.0
        %348 = vmatpush1.msra.mxu0 0.0
        %349 = vmatprep.subr.mxu0 0.0
        %350 = vmatpush1.msra.mxu0 0.0
        %351 = vmatprep.subr.mxu0 0.0
        %352 = vmatpush1.msra.mxu0 0.0
        %353 = vmatprep.subr.mxu0 0.0
        %354 = vmatpush1.msra.mxu0 0.0
        %355 = vmatprep.subr.mxu0 0.0
        %356 = vmatpush1.msra.mxu0 0.0
        %357 = vmatprep.subr.mxu0 0.0
        %358 = vmatpush1.msra.mxu0 0.0
        %359 = vmatprep.subr.mxu0 0.0
        %360 = vmatpush1.msra.mxu0 0.0
        %361 = vmatprep.subr.mxu0 0.0
        %362 = vmatpush1.msra.mxu0 0.0
        %363 = vmatprep.subr.mxu0 0.0
        %364 = vmatpush1.msra.mxu0 0.0
        %365 = vmatprep.subr.mxu0 0.0
        %366 = vmatpush1.msra.mxu0 0.0
        %367 = vmatprep.subr.mxu0 0.0
        %368 = vmatpush1.msra.mxu0 0.0
        %369 = vmatprep.subr.mxu0 0.0
        %370 = vmatpush1.msra.mxu0 0.0
        %371 = vmatprep.subr.mxu0 0.0
        %372 = vmatpush1.msra.mxu0 0.0
        %373 = vmatprep.subr.mxu0 0.0
        %374 = vmatpush1.msra.mxu0 0.0
        %375 = vmatprep.subr.mxu0 0.0
        %376 = vmatpush1.msra.mxu0 0.0
        %377 = vmatprep.subr.mxu0 0.0
        %378 = vmatpush1.msra.mxu0 0.0
        %379 = vmatprep.subr.mxu0 0.0
        %380 = vmatpush1.msra.mxu0 0.0
        %381 = vmatprep.mubr.f32.mxu0 0.0
        %382 = vmatmul.mubr.f32.gmra.mrb[0].mxu0 %v309
        %v383 = vpop.f32.mrb[0].mxu0
        %v384 = vadd.f32 0.0, %v383
        %v385 = vpop.f32.mrb[0].mxu0
        %386 = vmatprep.mubr.f32.mxu0 0.0
        %387 = vmatmul.mubr.f32.gmra.mrb[0].mxu0 %v312
        %v388 = vpop.f32.mrb[0].mxu0
        %v389 = vadd.f32 0.0, %v388
        %v390 = vpop.f32.mrb[0].mxu0
        %391 = vdwg.mxu0
        %392 = vst [vmem:[%s220] sm:$0xff] %v384
        %393 = vst [vmem:[%s220 + $0x8] sm:$0xff] %v389
        %s394 = sand.u32 %s106, 1
        %s395 = sand.u32 %s106, 1
        %s396 = smul.addr %s395, 16
        %s397 = scalar_lea.vmem [#allocation4], %s396
        // Predicated region
        $region71: #{_lambda_.2} parent=65 // pred_check
          %p398 = pneg %p116
        $region72: #{_lambda_.2} parent=65 // pred_check_branch
          %400 = sbr.rel (%p398) target = $region74
        $region73: #{_lambda_.2} parent=65 // pred_region
          %s401 = smul.addr %s18, 4
          %s402 = sadd.s32 %s19, %s401
          %s403 = smul.addr %s402, 8
          %s404 = scalar_lea.vmem %s3, %s403
          // Predicated region
          $region75: #{_lambda_.2} parent=73 // pred_check
            _
          $region76: #{_lambda_.2} parent=73 // pred_check_branch
            %406 = sbr.rel (0) target = $region78
          $region77: #{_lambda_.2} parent=73 // pred_region
            // Predicated region
            $region79: #{_lambda_.2} parent=77 // pred_check
              _
            $region80: #{_lambda_.2} parent=77 // pred_check_branch
              %408 = sbr.rel (0) target = $region82
            $region81: #{_lambda_.2} parent=77 // pred_region
              // Predicated region
              $region94: #{_lambda_.2} parent=81 // pred_check
                _
              $region95: #{_lambda_.2} parent=81 // pred_check_branch
                %425 = sbr.rel (0) target = $region97
              $region96: #{_lambda_.2} parent=81 // pred_region
                loop: start=0, step=1, limit=1
                $region98: #{_lambda_.2} parent=96 // loop_pre_header
                  _
                $region99: #{_lambda_.2} parent=96 // loop_header
                  %s427 = sphi 0, %s431
                  %p428 = scmp.ge.s32.totalorder %s427, 1
                  %s432 = sphi %s397, %s397
                  %s433 = sphi %s404, %s404
                $region100: #{_lambda_.2} parent=96 // loop_header_branch
                  %430 = sbr.rel (%p428) target = $region104
                $region101: #{_lambda_.2} parent=96 // loop_body
                  %v434 = vld [vmem:[%s432] sm:$0xff]
                  %435 = vst [vmem:[%s433] sm:$0xff] %v434
                  %v436 = vld [vmem:[%s432 + $0x8] sm:$0xff]
                  %437 = vst [vmem:[%s433 + $0x10] sm:$0xff] %v436
                $region102: #{_lambda_.2} parent=96 // loop_footer
                  %s431 = sadd.s32 1, %s427
                $region103: #{_lambda_.2} parent=96 // loop_footer_branch
                  %426 = sbr.rel target = $region99
                $region104: #{_lambda_.2} parent=96 // loop_exit
                  _
              $region97: #{_lambda_.2} parent=81 // pred_fallthru
                _
              // Predicated region
              $region105: #{_lambda_.2} parent=81 // pred_check
                _
              $region106: #{_lambda_.2} parent=81 // pred_check_branch
                %439 = sbr.rel target = $region108
              $region107: #{_lambda_.2} parent=81 // pred_region
                _
              $region108: #{_lambda_.2} parent=81 // pred_fallthru
                _
            $region82: #{_lambda_.2} parent=77 // pred_fallthru
              _
            // Predicated region
            $region83: #{_lambda_.2} parent=77 // pred_check
              _
            $region84: #{_lambda_.2} parent=77 // pred_check_branch
              %410 = sbr.rel target = $region86
            $region85: #{_lambda_.2} parent=77 // pred_region
              loop: start=0, step=1, limit=1
              $region87: #{_lambda_.2} parent=85 // loop_pre_header
                _
              $region88: #{_lambda_.2} parent=85 // loop_header
                %s413 = sphi 0, %s417
                %p414 = scmp.ge.s32.totalorder %s413, 1
                %s418 = sphi %s397, %s397
                %s419 = sphi %s404, %s404
              $region89: #{_lambda_.2} parent=85 // loop_header_branch
                %416 = sbr.rel (%p414) target = $region93
              $region90: #{_lambda_.2} parent=85 // loop_body
                %v420 = vld [vmem:[%s418] sm:$0xff]
                %421 = vst [vmem:[%s419] sm:$0xff] %v420
                %v422 = vld [vmem:[%s418 + $0x8] sm:$0xff]
                %423 = vst [vmem:[%s419 + $0x10] sm:$0xff] %v422
              $region91: #{_lambda_.2} parent=85 // loop_footer
                %s417 = sadd.s32 1, %s413
              $region92: #{_lambda_.2} parent=85 // loop_footer_branch
                %412 = sbr.rel target = $region88
              $region93: #{_lambda_.2} parent=85 // loop_exit
                _
            $region86: #{_lambda_.2} parent=77 // pred_fallthru
              _
          $region78: #{_lambda_.2} parent=73 // pred_fallthru
            _
          %440 = vnop
        $region74: #{_lambda_.2} parent=65 // pred_fallthru
          _
      $region66: #{_lambda_.2} parent=5 // pred_fallthru
        _
      %p441 = scmp.le.s32.totalorder 2, %s9
      // Predicated region
      $region109: #{_lambda_.2} parent=5 // pred_check
        %p442 = pneg %p441
      $region110: #{_lambda_.2} parent=5 // pred_check_branch
        %444 = sbr.rel (%p442) target = $region112
      $region111: #{_lambda_.2} parent=5 // pred_region
        %s445 = ssub.s32 %s9, 2
        // Predicated region
        $region113: #{_lambda_.2} parent=111 // pred_check
          %p446 = pneg %p122
        $region114: #{_lambda_.2} parent=111 // pred_check_branch
          %448 = sbr.rel (%p446) target = $region116
        $region115: #{_lambda_.2} parent=111 // pred_region
          %s449 = sand.u32 %s107, 1
          %s450 = sand.u32 %s107, 1
          %s451 = smul.addr %s450, 16
          %s452 = scalar_lea.vmem [#allocation4], %s451
        $region116: #{_lambda_.2} parent=111 // pred_fallthru
          _
      $region112: #{_lambda_.2} parent=5 // pred_fallthru
        _
    $region6: #{_lambda_.2} parent=1 // loop_footer
      %s13 = sadd.s32 1, %s9
    $region7: #{_lambda_.2} parent=1 // loop_footer_branch
      %8 = sbr.rel target = $region3
    $region8: #{_lambda_.2} parent=1 // loop_exit
      _

// kernel: _lambda_.3
$region0: #{_lambda_.3}
  #allocation0 [shape = 'u32[]', space=smem, size = 0x4, offset = 0x4, fixed_abs, tag = 'smem constant byte address 0x4 - core index']
  #allocation1 [shape = 'u32[144,128]{1,0:T(1,128)}', space=vmem, size = 0x12000, scoped, tag = 'internal scratch']
  %s0 = inlined_call_operand.vmem [shape: f32[2,2,16,504], index: 0, kind: input, shape index: {}]
  %s1 = inlined_call_operand.vmem [shape: f32[9,4,16], index: 1, kind: input, shape index: {}]
  %s2 = inlined_call_operand.vmem [shape: f32[2,4,768], index: 2, kind: output, shape index: {}]
  %s3 = sld [smem:[#allocation0]]
  $region41: #{_lambda_.3} parent=0
    _
  %s5 = ssub.s32 1, %s3
  %s6 = scalar_select 0, %s5, %s3
  loop: start=0, step=1, limit=6
  $region2: #{_lambda_.3} parent=0 // loop_pre_header
    _
  $region3: #{_lambda_.3} parent=0 // loop_header
    %s8 = sphi 0, %s12
    %p9 = scmp.ge.s32.totalorder %s8, 6
    %s15 = sphi 0, %s27
    %s16 = sphi 0, %s23
    %s17 = sphi 0, %s15
    %s18 = sphi 0, %s16
    %s19 = sphi 0, %s17
    %s20 = sphi 0, %s18
    %s32 = sphi 0, %s34
    %s35 = sphi 0, %s32
    %s36 = sphi 0, %s35
    %s52 = sphi 0, %s36
    %s56 = sphi 0, %s56
    %s58 = sphi 0, %s56
    %s59 = sphi 0, %s58
    %s73 = sphi 0, %s59
    %s81 = sphi 0, %s83
    %s84 = sphi 0, %s81
    %s85 = sphi 0, %s84
    %s101 = sphi 0, %s85
  $region4: #{_lambda_.3} parent=0 // loop_header_branch
    %11 = sbr.rel (%p9) target = $region8
  $region5: #{_lambda_.3} parent=0 // loop_body
    %s13 = ssub.s32 %s8, 1
    %s14 = ssub.s32 %s8, 2
    %s21 = sadd.s32 1, %s16
    %p22 = scmp.ge.s32.totalorder %s21, 2
    %s23 = scalar_select %p22, 0, %s21
    %s24 = sadd.s32 1, %s15
    %s25 = scalar_select %p22, %s24, %s15
    %p26 = scmp.ge.s32.totalorder %s25, 2
    %s27 = scalar_select %p26, 0, %s25
    %s28 = ssub.s32 %s15, %s27
    %s29 = ssub.s32 %s16, %s23
    %s30 = sor.u32 %s28, %s29
    %p31 = scmp.eq.s32.totalorder %s30, 0
    %s33 = sadd.s32 %s32, 1
    %s34 = scalar_select %p31, %s32, %s33
    %p37 = pneg %p31
    %p38 = scmp.eq.s32.totalorder %s8, 3
    %p39 = por %p37, %p38
    %p40 = scmp.ne.s32.totalorder %s32, %s35
    %p41 = scmp.eq.s32.totalorder %s8, 0
    %p42 = por %p40, %p41
    %p43 = scmp.ne.s32.totalorder %s32, %s35
    %p44 = scmp.eq.s32.totalorder %s13, 3
    %p45 = por %p43, %p44
    %p46 = scmp.ne.s32.totalorder %s35, %s36
    %p47 = scmp.eq.s32.totalorder %s13, 0
    %p48 = por %p46, %p47
    %p49 = scmp.ne.s32.totalorder %s35, %s36
    %p50 = scmp.eq.s32.totalorder %s14, 3
    %p51 = por %p49, %p50
    %p53 = scmp.ne.s32.totalorder %s36, %s52
    %p54 = scmp.eq.s32.totalorder %s14, 0
    %p55 = por %p53, %p54
    %s57 = sadd.s32 %s56, 1
    %p60 = scmp.eq.s32.totalorder %s8, 3
    %p61 = scmp.ne.s32.totalorder %s56, %s58
    %p62 = scmp.eq.s32.totalorder %s8, 0
    %p63 = por %p61, %p62
    %p64 = scmp.ne.s32.totalorder %s56, %s58
    %p65 = scmp.eq.s32.totalorder %s13, 3
    %p66 = por %p64, %p65
    %p67 = scmp.ne.s32.totalorder %s58, %s59
    %p68 = scmp.eq.s32.totalorder %s13, 0
    %p69 = por %p67, %p68
    %p70 = scmp.ne.s32.totalorder %s58, %s59
    %p71 = scmp.eq.s32.totalorder %s14, 3
    %p72 = por %p70, %p71
    %p74 = scmp.ne.s32.totalorder %s59, %s73
    %p75 = scmp.eq.s32.totalorder %s14, 0
    %p76 = por %p74, %p75
    %s77 = ssub.s32 %s15, %s27
    %s78 = ssub.s32 %s16, %s23
    %s79 = sor.u32 %s77, %s78
    %p80 = scmp.eq.s32.totalorder %s79, 0
    %s82 = sadd.s32 %s81, 1
    %s83 = scalar_select %p80, %s81, %s82
    %p86 = pneg %p80
    %p87 = scmp.eq.s32.totalorder %s8, 3
    %p88 = por %p86, %p87
    %p89 = scmp.ne.s32.totalorder %s81, %s84
    %p90 = scmp.eq.s32.totalorder %s8, 0
    %p91 = por %p89, %p90
    %p92 = scmp.ne.s32.totalorder %s81, %s84
    %p93 = scmp.eq.s32.totalorder %s13, 3
    %p94 = por %p92, %p93
    %p95 = scmp.ne.s32.totalorder %s84, %s85
    %p96 = scmp.eq.s32.totalorder %s13, 0
    %p97 = por %p95, %p96
    %p98 = scmp.ne.s32.totalorder %s84, %s85
    %p99 = scmp.eq.s32.totalorder %s14, 3
    %p100 = por %p98, %p99
    %p102 = scmp.ne.s32.totalorder %s85, %s101
    %p103 = scmp.eq.s32.totalorder %s14, 0
    %p104 = por %p102, %p103
    %p105 = scmp.le.s32.totalorder 1, %s8
    %p106 = scmp.lt.s32.totalorder %s8, 5
    %p107 = pnand %p105, %p106
    %p108 = pneg %p107
    // Predicated region
    $region9: #{_lambda_.3} parent=5 // pred_check
      _
    $region10: #{_lambda_.3} parent=5 // pred_check_branch
      %110 = sbr.rel (%p107) target = $region12
    $region11: #{_lambda_.3} parent=5 // pred_region
      %s111 = ssub.s32 %s8, 1
      // Predicated region
      $region13: #{_lambda_.3} parent=11 // pred_check
        %p112 = pneg %p69
      $region14: #{_lambda_.3} parent=11 // pred_check_branch
        %114 = sbr.rel (%p112) target = $region16
      $region15: #{_lambda_.3} parent=11 // pred_region
        _
      $region16: #{_lambda_.3} parent=11 // pred_fallthru
        _
    $region12: #{_lambda_.3} parent=5 // pred_fallthru
      _
    %p115 = scmp.lt.s32.totalorder %s8, 4
    // Predicated region
    $region17: #{_lambda_.3} parent=5 // pred_check
      %p116 = pneg %p115
    $region18: #{_lambda_.3} parent=5 // pred_check_branch
      %118 = sbr.rel (%p116) target = $region20
    $region19: #{_lambda_.3} parent=5 // pred_region
      // Predicated region
      $region21: #{_lambda_.3} parent=19 // pred_check
        %p119 = pneg %p42
      $region22: #{_lambda_.3} parent=19 // pred_check_branch
        %121 = sbr.rel (%p119) target = $region24
      $region23: #{_lambda_.3} parent=19 // pred_region
        %p122 = scmp.lt.s32.totalorder %s15, 1
        %s123 = scalar_select %p122, %s15, 1
        %p124 = scmp.lt.s32.totalorder %s16, 1
        %s125 = scalar_select %p124, %s16, 1
        %s126 = smul.addr %s125, 8
        %s127 = smul.addr %s123, 16
        %s128 = sadd.s32 %s126, %s127
        %s129 = smul.addr %s128, 8
        %s130 = scalar_lea.vmem %s0, %s129
      $region24: #{_lambda_.3} parent=19 // pred_fallthru
        _
    $region20: #{_lambda_.3} parent=5 // pred_fallthru
      _
    %p131 = scmp.le.s32.totalorder 1, %s8
    %p132 = scmp.lt.s32.totalorder %s8, 5
    %p133 = pnand %p131, %p132
    %p134 = pneg %p133
    // Predicated region
    $region25: #{_lambda_.3} parent=5 // pred_check
      _
    $region26: #{_lambda_.3} parent=5 // pred_check_branch
      %136 = sbr.rel (%p133) target = $region28
    $region27: #{_lambda_.3} parent=5 // pred_region
      %s137 = ssub.s32 %s8, 1
      %p138 = scmp.lt.s32.totalorder %s17, 1
      %s139 = scalar_select %p138, %s17, 1
      %p140 = scmp.lt.s32.totalorder %s18, 1
      %s141 = scalar_select %p140, %s18, 1
      %s142 = smul.addr %s141, 8
      %s143 = smul.addr %s139, 16
      %s144 = sadd.s32 %s142, %s143
      %s145 = smul.addr %s144, 8
      %s146 = scalar_lea.vmem %s0, %s145
      %p147 = pneg %p48
      %p148 = pneg %p45
      %p149 = pneg %p69
      %p150 = pneg %p66
      %p151 = pneg %p97
      %p152 = pneg %p94
      %s153 = smul.u32 3, %s18
      %p154 = scmp.lt.s32.totalorder %s17, 1
      %s155 = scalar_select %p154, %s17, 1
      %p156 = scmp.lt.s32.totalorder %s153, 5
      %s157 = scalar_select %p156, %s153, 5
      %s158 = smul.addr %s155, 6
      %s159 = sadd.s32 %s157, %s158
      %s160 = smul.addr %s159, 4
      %s161 = scalar_lea.vmem %s2, %s160
      %p162 = scmp.lt.s32.totalorder %s17, 1
      %s163 = scalar_select %p162, %s17, 1
      %p164 = scmp.lt.s32.totalorder %s18, 1
      %s165 = scalar_select %p164, %s18, 1
      %s166 = smul.addr %s165, 8
      %s167 = smul.addr %s163, 16
      %s168 = sadd.s32 %s166, %s167
      %s169 = smul.addr %s168, 8
      %s170 = scalar_lea.vmem %s0, %s169
      %s171 = smul.u32 3, %s18
      %p172 = scmp.lt.s32.totalorder %s17, 1
      %s173 = scalar_select %p172, %s17, 1
      %p174 = scmp.lt.s32.totalorder %s171, 5
      %s175 = scalar_select %p174, %s171, 5
      %s176 = smul.addr %s173, 6
      %s177 = sadd.s32 %s175, %s176
      %s178 = smul.addr %s177, 4
      %s179 = scalar_lea.vmem %s2, %s178
      %s180 = smul.u32 3, %s18
      %v181 = vld [vmem:[%s1] sm:$0xf]
      %v182 = vld [vmem:[%s170] sm:$0xff]
      %v183 = vld [vmem:[%s170 + $0x8] sm:$0xff]
      %v184 = vld [vmem:[%s170 + $0x10] sm:$0xff]
      %v185 = vld [vmem:[%s170 + $0x20] sm:$0xff]
      %v186 = vld [vmem:[%s170 + $0x28] sm:$0xff]
      %v187 = vld [vmem:[%s170 + $0x30] sm:$0xff]
      %s188 = scalar_lea.vmem %s1, 4
      %v189 = vld [vmem:[%s188] sm:$0xf]
      %v190 = vld [vmem:[%s170 + $0x18] sm:$0xff]
      %v191 = vld [vmem:[%s170 + $0x38] sm:$0xff]
      %200 = vrot.lane.b32.xlu0 %v182, 126
      %v201 = vpop.permute.xlu0 %200
      %202 = vrot.lane.b32.xlu0 %v183, 126
      %v203 = vpop.permute.xlu0 %202
      %204 = vrot.lane.b32.xlu0 %v184, 126
      %v205 = vpop.permute.xlu0 %204
      %206 = vrot.lane.b32.xlu0 %v190, 126
      %v207 = vpop.permute.xlu0 %206
      %208 = vrot.lane.b32.xlu0 %v185, 126
      %v209 = vpop.permute.xlu0 %208
      %210 = vrot.lane.b32.xlu0 %v186, 126
      %v211 = vpop.permute.xlu0 %210
      %212 = vrot.lane.b32.xlu0 %v187, 126
      %v213 = vpop.permute.xlu0 %212
      %214 = vrot.lane.b32.xlu0 %v191, 126
      %v215 = vpop.permute.xlu0 %214
      %vm216 = vcmask 1031168
      %v217 = vsel %vm216, %v201, %v203
      %v218 = vsel %vm216, %v203, %v205
      %v219 = vsel %vm216, %v205, %v207
      %v220 = vsel %vm216, %v209, %v211
      %v221 = vsel %vm216, %v211, %v213
      %v222 = vsel %vm216, %v213, %v215
      %vm229 = vcmask 130048
      %v231 = vsel %vm229, %v189, 0
      %233 = vmatprep.subr.mxu0 %v218
      %234 = vmatpush1.msra.mxu0 %v217
      %235 = vmatprep.subr.mxu0 %v221
      %236 = vmatpush1.msra.mxu0 %v220
      %237 = vmatprep.subr.mxu0 0.0
      %238 = vmatpush1.msra.mxu0 0.0
      %239 = vmatprep.subr.mxu0 0.0
      %240 = vmatpush1.msra.mxu0 0.0
      %241 = vmatprep.subr.mxu0 0.0
      %242 = vmatpush1.msra.mxu0 0.0
      %243 = vmatprep.subr.mxu0 0.0
      %244 = vmatpush1.msra.mxu0 0.0
      %245 = vmatprep.subr.mxu0 0.0
      %246 = vmatpush1.msra.mxu0 0.0
      %247 = vmatprep.subr.mxu0 0.0
      %248 = vmatpush1.msra.mxu0 0.0
      %249 = vmatprep.subr.mxu0 0.0
      %250 = vmatpush1.msra.mxu0 0.0
      %251 = vmatprep.subr.mxu0 0.0
      %252 = vmatpush1.msra.mxu0 0.0
      %253 = vmatprep.subr.mxu0 0.0
      %254 = vmatpush1.msra.mxu0 0.0
      %255 = vmatprep.subr.mxu0 0.0
      %256 = vmatpush1.msra.mxu0 0.0
      %257 = vmatprep.subr.mxu0 0.0
      %258 = vmatpush1.msra.mxu0 0.0
      %259 = vmatprep.subr.mxu0 0.0
      %260 = vmatpush1.msra.mxu0 0.0
      %261 = vmatprep.subr.mxu0 0.0
      %262 = vmatpush1.msra.mxu0 0.0
      %263 = vmatprep.subr.mxu0 0.0
      %264 = vmatpush1.msra.mxu0 0.0
      %265 = vmatprep.subr.mxu0 0.0
      %266 = vmatpush1.msra.mxu0 0.0
      %267 = vmatprep.subr.mxu0 0.0
      %268 = vmatpush1.msra.mxu0 0.0
      %269 = vmatprep.subr.mxu0 0.0
      %270 = vmatpush1.msra.mxu0 0.0
      %271 = vmatprep.subr.mxu0 0.0
      %272 = vmatpush1.msra.mxu0 0.0
      %273 = vmatprep.subr.mxu0 0.0
      %274 = vmatpush1.msra.mxu0 0.0
      %275 = vmatprep.subr.mxu0 0.0
      %276 = vmatpush1.msra.mxu0 0.0
      %277 = vmatprep.subr.mxu0 0.0
      %278 = vmatpush1.msra.mxu0 0.0
      %279 = vmatprep.subr.mxu0 0.0
      %280 = vmatpush1.msra.mxu0 0.0
      %281 = vmatprep.subr.mxu0 0.0
      %282 = vmatpush1.msra.mxu0 0.0
      %283 = vmatprep.subr.mxu0 0.0
      %284 = vmatpush1.msra.mxu0 0.0
      %285 = vmatprep.subr.mxu0 0.0
      %286 = vmatpush1.msra.mxu0 0.0
      %287 = vmatprep.subr.mxu0 0.0
      %288 = vmatpush1.msra.mxu0 0.0
      %289 = vmatprep.subr.mxu0 0.0
      %290 = vmatpush1.msra.mxu0 0.0
      %291 = vmatprep.subr.mxu0 0.0
      %292 = vmatpush1.msra.mxu0 0.0
      %293 = vmatprep.subr.mxu0 0.0
      %294 = vmatpush1.msra.mxu0 0.0
      %295 = vmatprep.subr.mxu0 0.0
      %296 = vmatpush1.msra.mxu0 0.0
      %297 = vmatprep.mubr.f32.mxu0 0.0
      %298 = vmatmul.mubr.f32.gmra.mrb[0].mxu0 %v231
      %v299 = vpop.f32.mrb[0].mxu0
      %v300 = vadd.f32 0.0, %v299
      %v301 = vpop.f32.mrb[0].mxu0
      %v302 = vadd.f32 0.0, %v301
      %303 = vdwg.mxu0
      %304 = vmatprep.subr.mxu0 0.0
      %305 = vmatpush1.msra.mxu0 %v219
      %306 = vmatprep.subr.mxu0 0.0
      %307 = vmatpush1.msra.mxu0 %v222
      %308 = vmatprep.subr.mxu0 0.0
      %309 = vmatpush1.msra.mxu0 0.0
      %310 = vmatprep.subr.mxu0 0.0
      %311 = vmatpush1.msra.mxu0 0.0
      %312 = vmatprep.subr.mxu0 0.0
      %313 = vmatpush1.msra.mxu0 0.0
      %314 = vmatprep.subr.mxu0 0.0
      %315 = vmatpush1.msra.mxu0 0.0
      %316 = vmatprep.subr.mxu0 0.0
      %317 = vmatpush1.msra.mxu0 0.0
      %318 = vmatprep.subr.mxu0 0.0
      %319 = vmatpush1.msra.mxu0 0.0
      %320 = vmatprep.subr.mxu0 0.0
      %321 = vmatpush1.msra.mxu0 0.0
      %322 = vmatprep.subr.mxu0 0.0
      %323 = vmatpush1.msra.mxu0 0.0
      %324 = vmatprep.subr.mxu0 0.0
      %325 = vmatpush1.msra.mxu0 0.0
      %326 = vmatprep.subr.mxu0 0.0
      %327 = vmatpush1.msra.mxu0 0.0
      %328 = vmatprep.subr.mxu0 0.0
      %329 = vmatpush1.msra.mxu0 0.0
      %330 = vmatprep.subr.mxu0 0.0
      %331 = vmatpush1.msra.mxu0 0.0
      %332 = vmatprep.subr.mxu0 0.0
      %333 = vmatpush1.msra.mxu0 0.0
      %334 = vmatprep.subr.mxu0 0.0
      %335 = vmatpush1.msra.mxu0 0.0
      %336 = vmatprep.subr.mxu0 0.0
      %337 = vmatpush1.msra.mxu0 0.0
      %338 = vmatprep.subr.mxu0 0.0
      %339 = vmatpush1.msra.mxu0 0.0
      %340 = vmatprep.subr.mxu0 0.0
      %341 = vmatpush1.msra.mxu0 0.0
      %342 = vmatprep.subr.mxu0 0.0
      %343 = vmatpush1.msra.mxu0 0.0
      %344 = vmatprep.subr.mxu0 0.0
      %345 = vmatpush1.msra.mxu0 0.0
      %346 = vmatprep.subr.mxu0 0.0
      %347 = vmatpush1.msra.mxu0 0.0
      %348 = vmatprep.subr.mxu0 0.0
      %349 = vmatpush1.msra.mxu0 0.0
      %350 = vmatprep.subr.mxu0 0.0
      %351 = vmatpush1.msra.mxu0 0.0
      %352 = vmatprep.subr.mxu0 0.0
      %353 = vmatpush1.msra.mxu0 0.0
      %354 = vmatprep.subr.mxu0 0.0
      %355 = vmatpush1.msra.mxu0 0.0
      %356 = vmatprep.subr.mxu0 0.0
      %357 = vmatpush1.msra.mxu0 0.0
      %358 = vmatprep.subr.mxu0 0.0
      %359 = vmatpush1.msra.mxu0 0.0
      %360 = vmatprep.subr.mxu0 0.0
      %361 = vmatpush1.msra.mxu0 0.0
      %362 = vmatprep.subr.mxu0 0.0
      %363 = vmatpush1.msra.mxu0 0.0
      %364 = vmatprep.subr.mxu0 0.0
      %365 = vmatpush1.msra.mxu0 0.0
      %366 = vmatprep.subr.mxu0 0.0
      %367 = vmatpush1.msra.mxu0 0.0
      %368 = vmatprep.mubr.f32.mxu0 0.0
      %369 = vmatmul.mubr.f32.gmra.mrb[0].mxu0 %v231
      %v370 = vpop.f32.mrb[0].mxu0
      %v371 = vadd.f32 0.0, %v370
      %v372 = vpop.f32.mrb[0].mxu0
      %373 = vdwg.mxu0
      %v375 = vsel %vm229, %v181, 0
      %377 = vmatprep.subr.mxu0 %v183
      %378 = vmatpush1.msra.mxu0 %v182
      %379 = vmatprep.subr.mxu0 %v186
      %380 = vmatpush1.msra.mxu0 %v185
      %381 = vmatprep.subr.mxu0 0.0
      %382 = vmatpush1.msra.mxu0 0.0
      %383 = vmatprep.subr.mxu0 0.0
      %384 = vmatpush1.msra.mxu0 0.0
      %385 = vmatprep.subr.mxu0 0.0
      %386 = vmatpush1.msra.mxu0 0.0
      %387 = vmatprep.subr.mxu0 0.0
      %388 = vmatpush1.msra.mxu0 0.0
      %389 = vmatprep.subr.mxu0 0.0
      %390 = vmatpush1.msra.mxu0 0.0
      %391 = vmatprep.subr.mxu0 0.0
      %392 = vmatpush1.msra.mxu0 0.0
      %393 = vmatprep.subr.mxu0 0.0
      %394 = vmatpush1.msra.mxu0 0.0
      %395 = vmatprep.subr.mxu0 0.0
      %396 = vmatpush1.msra.mxu0 0.0
      %397 = vmatprep.subr.mxu0 0.0
      %398 = vmatpush1.msra.mxu0 0.0
      %399 = vmatprep.subr.mxu0 0.0
      %400 = vmatpush1.msra.mxu0 0.0
      %401 = vmatprep.subr.mxu0 0.0
      %402 = vmatpush1.msra.mxu0 0.0
      %403 = vmatprep.subr.mxu0 0.0
      %404 = vmatpush1.msra.mxu0 0.0
      %405 = vmatprep.subr.mxu0 0.0
      %406 = vmatpush1.msra.mxu0 0.0
      %407 = vmatprep.subr.mxu0 0.0
      %408 = vmatpush1.msra.mxu0 0.0
      %409 = vmatprep.subr.mxu0 0.0
      %410 = vmatpush1.msra.mxu0 0.0
      %411 = vmatprep.subr.mxu0 0.0
      %412 = vmatpush1.msra.mxu0 0.0
      %413 = vmatprep.subr.mxu0 0.0
      %414 = vmatpush1.msra.mxu0 0.0
      %415 = vmatprep.subr.mxu0 0.0
      %416 = vmatpush1.msra.mxu0 0.0
      %417 = vmatprep.subr.mxu0 0.0
      %418 = vmatpush1.msra.mxu0 0.0
      %419 = vmatprep.subr.mxu0 0.0
      %420 = vmatpush1.msra.mxu0 0.0
      %421 = vmatprep.subr.mxu0 0.0
      %422 = vmatpush1.msra.mxu0 0.0
      %423 = vmatprep.subr.mxu0 0.0
      %424 = vmatpush1.msra.mxu0 0.0
      %425 = vmatprep.subr.mxu0 0.0
      %426 = vmatpush1.msra.mxu0 0.0
      %427 = vmatprep.subr.mxu0 0.0
      %428 = vmatpush1.msra.mxu0 0.0
      %429 = vmatprep.subr.mxu0 0.0
      %430 = vmatpush1.msra.mxu0 0.0
      %431 = vmatprep.subr.mxu0 0.0
      %432 = vmatpush1.msra.mxu0 0.0
      %433 = vmatprep.subr.mxu0 0.0
      %434 = vmatpush1.msra.mxu0 0.0
      %435 = vmatprep.subr.mxu0 0.0
      %436 = vmatpush1.msra.mxu0 0.0
      %437 = vmatprep.subr.mxu0 0.0
      %438 = vmatpush1.msra.mxu0 0.0
      %439 = vmatprep.subr.mxu0 0.0
      %440 = vmatpush1.msra.mxu0 0.0
      %441 = vmatprep.mubr.f32.mxu0 0.0
      %442 = vmatmul.mubr.f32.gmra.mrb[0].mxu0 %v375
      %v443 = vpop.f32.mrb[0].mxu0
      %v444 = vadd.f32 %v300, %v443
      %v445 = vpop.f32.mrb[0].mxu0
      %v446 = vadd.f32 %v302, %v445
      %447 = vdwg.mxu0
      %448 = vmatprep.subr.mxu0 0.0
      %449 = vmatpush1.msra.mxu0 %v184
      %450 = vmatprep.subr.mxu0 0.0
      %451 = vmatpush1.msra.mxu0 %v187
      %452 = vmatprep.subr.mxu0 0.0
      %453 = vmatpush1.msra.mxu0 0.0
      %454 = vmatprep.subr.mxu0 0.0
      %455 = vmatpush1.msra.mxu0 0.0
      %456 = vmatprep.subr.mxu0 0.0
      %457 = vmatpush1.msra.mxu0 0.0
      %458 = vmatprep.subr.mxu0 0.0
      %459 = vmatpush1.msra.mxu0 0.0
      %460 = vmatprep.subr.mxu0 0.0
      %461 = vmatpush1.msra.mxu0 0.0
      %462 = vmatprep.subr.mxu0 0.0
      %463 = vmatpush1.msra.mxu0 0.0
      %464 = vmatprep.subr.mxu0 0.0
      %465 = vmatpush1.msra.mxu0 0.0
      %466 = vmatprep.subr.mxu0 0.0
      %467 = vmatpush1.msra.mxu0 0.0
      %468 = vmatprep.subr.mxu0 0.0
      %469 = vmatpush1.msra.mxu0 0.0
      %470 = vmatprep.subr.mxu0 0.0
      %471 = vmatpush1.msra.mxu0 0.0
      %472 = vmatprep.subr.mxu0 0.0
      %473 = vmatpush1.msra.mxu0 0.0
      %474 = vmatprep.subr.mxu0 0.0
      %475 = vmatpush1.msra.mxu0 0.0
      %476 = vmatprep.subr.mxu0 0.0
      %477 = vmatpush1.msra.mxu0 0.0
      %478 = vmatprep.subr.mxu0 0.0
      %479 = vmatpush1.msra.mxu0 0.0
      %480 = vmatprep.subr.mxu0 0.0
      %481 = vmatpush1.msra.mxu0 0.0
      %482 = vmatprep.subr.mxu0 0.0
      %483 = vmatpush1.msra.mxu0 0.0
      %484 = vmatprep.subr.mxu0 0.0
      %485 = vmatpush1.msra.mxu0 0.0
      %486 = vmatprep.subr.mxu0 0.0
      %487 = vmatpush1.msra.mxu0 0.0
      %488 = vmatprep.subr.mxu0 0.0
      %489 = vmatpush1.msra.mxu0 0.0
      %490 = vmatprep.subr.mxu0 0.0
      %491 = vmatpush1.msra.mxu0 0.0
      %492 = vmatprep.subr.mxu0 0.0
      %493 = vmatpush1.msra.mxu0 0.0
      %494 = vmatprep.subr.mxu0 0.0
      %495 = vmatpush1.msra.mxu0 0.0
      %496 = vmatprep.subr.mxu0 0.0
      %497 = vmatpush1.msra.mxu0 0.0
      %498 = vmatprep.subr.mxu0 0.0
      %499 = vmatpush1.msra.mxu0 0.0
      %500 = vmatprep.subr.mxu0 0.0
      %501 = vmatpush1.msra.mxu0 0.0
      %502 = vmatprep.subr.mxu0 0.0
      %503 = vmatpush1.msra.mxu0 0.0
      %504 = vmatprep.subr.mxu0 0.0
      %505 = vmatpush1.msra.mxu0 0.0
      %506 = vmatprep.subr.mxu0 0.0
      %507 = vmatpush1.msra.mxu0 0.0
      %508 = vmatprep.subr.mxu0 0.0
      %509 = vmatpush1.msra.mxu0 0.0
      %510 = vmatprep.subr.mxu0 0.0
      %511 = vmatpush1.msra.mxu0 0.0
      %512 = vmatprep.mubr.f32.mxu0 0.0
      %513 = vmatmul.mubr.f32.gmra.mrb[0].mxu0 %v375
      %v514 = vpop.f32.mrb[0].mxu0
      %v515 = vadd.f32 %v371, %v514
      %v516 = vpop.f32.mrb[0].mxu0
      %517 = vdwg.mxu0
      %s518 = scalar_lea.vmem %s1, 8
      %v519 = vld [vmem:[%s518] sm:$0xf]
      %520 = vrot.lane.b32.xlu0 %v182, 124
      %v521 = vpop.permute.xlu0 %520
      %522 = vrot.lane.b32.xlu0 %v183, 124
      %v523 = vpop.permute.xlu0 %522
      %524 = vrot.lane.b32.xlu0 %v184, 124
      %v525 = vpop.permute.xlu0 %524
      %526 = vrot.lane.b32.xlu0 %v190, 124
      %v527 = vpop.permute.xlu0 %526
      %528 = vrot.lane.b32.xlu0 %v185, 124
      %v529 = vpop.permute.xlu0 %528
      %530 = vrot.lane.b32.xlu0 %v186, 124
      %v531 = vpop.permute.xlu0 %530
      %532 = vrot.lane.b32.xlu0 %v187, 124
      %v533 = vpop.permute.xlu0 %532
      %534 = vrot.lane.b32.xlu0 %v191, 124
      %v535 = vpop.permute.xlu0 %534
      %vm536 = vcmask 1014784
      %v537 = vsel %vm536, %v521, %v523
      %v538 = vsel %vm536, %v523, %v525
      %v539 = vsel %vm536, %v525, %v527
      %v540 = vsel %vm536, %v529, %v531
      %v541 = vsel %vm536, %v531, %v533
      %v542 = vsel %vm536, %v533, %v535
      %v550 = vsel %vm229, %v519, 0
      %552 = vmatprep.subr.mxu0 %v538
      %553 = vmatpush1.msra.mxu0 %v537
      %554 = vmatprep.subr.mxu0 %v541
      %555 = vmatpush1.msra.mxu0 %v540
      %556 = vmatprep.subr.mxu0 0.0
      %557 = vmatpush1.msra.mxu0 0.0
      %558 = vmatprep.subr.mxu0 0.0
      %559 = vmatpush1.msra.mxu0 0.0
      %560 = vmatprep.subr.mxu0 0.0
      %561 = vmatpush1.msra.mxu0 0.0
      %562 = vmatprep.subr.mxu0 0.0
      %563 = vmatpush1.msra.mxu0 0.0
      %564 = vmatprep.subr.mxu0 0.0
      %565 = vmatpush1.msra.mxu0 0.0
      %566 = vmatprep.subr.mxu0 0.0
      %567 = vmatpush1.msra.mxu0 0.0
      %568 = vmatprep.subr.mxu0 0.0
      %569 = vmatpush1.msra.mxu0 0.0
      %570 = vmatprep.subr.mxu0 0.0
      %571 = vmatpush1.msra.mxu0 0.0
      %572 = vmatprep.subr.mxu0 0.0
      %573 = vmatpush1.msra.mxu0 0.0
      %574 = vmatprep.subr.mxu0 0.0
      %575 = vmatpush1.msra.mxu0 0.0
      %576 = vmatprep.subr.mxu0 0.0
      %577 = vmatpush1.msra.mxu0 0.0
      %578 = vmatprep.subr.mxu0 0.0
      %579 = vmatpush1.msra.mxu0 0.0
      %580 = vmatprep.subr.mxu0 0.0
      %581 = vmatpush1.msra.mxu0 0.0
      %582 = vmatprep.subr.mxu0 0.0
      %583 = vmatpush1.msra.mxu0 0.0
      %584 = vmatprep.subr.mxu0 0.0
      %585 = vmatpush1.msra.mxu0 0.0
      %586 = vmatprep.subr.mxu0 0.0
      %587 = vmatpush1.msra.mxu0 0.0
      %588 = vmatprep.subr.mxu0 0.0
      %589 = vmatpush1.msra.mxu0 0.0
      %590 = vmatprep.subr.mxu0 0.0
      %591 = vmatpush1.msra.mxu0 0.0
      %592 = vmatprep.subr.mxu0 0.0
      %593 = vmatpush1.msra.mxu0 0.0
      %594 = vmatprep.subr.mxu0 0.0
      %595 = vmatpush1.msra.mxu0 0.0
      %596 = vmatprep.subr.mxu0 0.0
      %597 = vmatpush1.msra.mxu0 0.0
      %598 = vmatprep.subr.mxu0 0.0
      %599 = vmatpush1.msra.mxu0 0.0
      %600 = vmatprep.subr.mxu0 0.0
      %601 = vmatpush1.msra.mxu0 0.0
      %602 = vmatprep.subr.mxu0 0.0
      %603 = vmatpush1.msra.mxu0 0.0
      %604 = vmatprep.subr.mxu0 0.0
      %605 = vmatpush1.msra.mxu0 0.0
      %606 = vmatprep.subr.mxu0 0.0
      %607 = vmatpush1.msra.mxu0 0.0
      %608 = vmatprep.subr.mxu0 0.0
      %609 = vmatpush1.msra.mxu0 0.0
      %610 = vmatprep.subr.mxu0 0.0
      %611 = vmatpush1.msra.mxu0 0.0
      %612 = vmatprep.subr.mxu0 0.0
      %613 = vmatpush1.msra.mxu0 0.0
      %614 = vmatprep.subr.mxu0 0.0
      %615 = vmatpush1.msra.mxu0 0.0
      %616 = vmatprep.mubr.f32.mxu0 0.0
      %617 = vmatmul.mubr.f32.gmra.mrb[0].mxu0 %v550
      %v618 = vpop.f32.mrb[0].mxu0
      %v619 = vadd.f32 0.0, %v618
      %v620 = vpop.f32.mrb[0].mxu0
      %v621 = vadd.f32 0.0, %v620
      %622 = vdwg.mxu0
      %623 = vmatprep.subr.mxu0 0.0
      %624 = vmatpush1.msra.mxu0 %v539
      %625 = vmatprep.subr.mxu0 0.0
      %626 = vmatpush1.msra.mxu0 %v542
      %627 = vmatprep.subr.mxu0 0.0
      %628 = vmatpush1.msra.mxu0 0.0
      %629 = vmatprep.subr.mxu0 0.0
      %630 = vmatpush1.msra.mxu0 0.0
      %631 = vmatprep.subr.mxu0 0.0
      %632 = vmatpush1.msra.mxu0 0.0
      %633 = vmatprep.subr.mxu0 0.0
      %634 = vmatpush1.msra.mxu0 0.0
      %635 = vmatprep.subr.mxu0 0.0
      %636 = vmatpush1.msra.mxu0 0.0
      %637 = vmatprep.subr.mxu0 0.0
      %638 = vmatpush1.msra.mxu0 0.0
      %639 = vmatprep.subr.mxu0 0.0
      %640 = vmatpush1.msra.mxu0 0.0
      %641 = vmatprep.subr.mxu0 0.0
      %642 = vmatpush1.msra.mxu0 0.0
      %643 = vmatprep.subr.mxu0 0.0
      %644 = vmatpush1.msra.mxu0 0.0
      %645 = vmatprep.subr.mxu0 0.0
      %646 = vmatpush1.msra.mxu0 0.0
      %647 = vmatprep.subr.mxu0 0.0
      %648 = vmatpush1.msra.mxu0 0.0
      %649 = vmatprep.subr.mxu0 0.0
      %650 = vmatpush1.msra.mxu0 0.0
      %651 = vmatprep.subr.mxu0 0.0
      %652 = vmatpush1.msra.mxu0 0.0
      %653 = vmatprep.subr.mxu0 0.0
      %654 = vmatpush1.msra.mxu0 0.0
      %655 = vmatprep.subr.mxu0 0.0
      %656 = vmatpush1.msra.mxu0 0.0
      %657 = vmatprep.subr.mxu0 0.0
      %658 = vmatpush1.msra.mxu0 0.0
      %659 = vmatprep.subr.mxu0 0.0
      %660 = vmatpush1.msra.mxu0 0.0
      %661 = vmatprep.subr.mxu0 0.0
      %662 = vmatpush1.msra.mxu0 0.0
      %663 = vmatprep.subr.mxu0 0.0
      %664 = vmatpush1.msra.mxu0 0.0
      %665 = vmatprep.subr.mxu0 0.0
      %666 = vmatpush1.msra.mxu0 0.0
      %667 = vmatprep.subr.mxu0 0.0
      %668 = vmatpush1.msra.mxu0 0.0
      %669 = vmatprep.subr.mxu0 0.0
      %670 = vmatpush1.msra.mxu0 0.0
      %671 = vmatprep.subr.mxu0 0.0
      %672 = vmatpush1.msra.mxu0 0.0
      %673 = vmatprep.subr.mxu0 0.0
      %674 = vmatpush1.msra.mxu0 0.0
      %675 = vmatprep.subr.mxu0 0.0
      %676 = vmatpush1.msra.mxu0 0.0
      %677 = vmatprep.subr.mxu0 0.0
      %678 = vmatpush1.msra.mxu0 0.0
      %679 = vmatprep.subr.mxu0 0.0
      %680 = vmatpush1.msra.mxu0 0.0
      %681 = vmatprep.subr.mxu0 0.0
      %682 = vmatpush1.msra.mxu0 0.0
      %683 = vmatprep.subr.mxu0 0.0
      %684 = vmatpush1.msra.mxu0 0.0
      %685 = vmatprep.subr.mxu0 0.0
      %686 = vmatpush1.msra.mxu0 0.0
      %687 = vmatprep.mubr.f32.mxu0 0.0
      %688 = vmatmul.mubr.f32.gmra.mrb[0].mxu0 %v550
      %v689 = vpop.f32.mrb[0].mxu0
      %v690 = vadd.f32 0.0, %v689
      %v691 = vpop.f32.mrb[0].mxu0
      %692 = vdwg.mxu0
      %v693 = vadd.f32 %v444, %v619
      %v694 = vadd.f32 %v446, %v621
      %v695 = vadd.f32 %v515, %v690
      %s696 = scalar_lea.vmem %s1, 12
      %v697 = vld [vmem:[%s696] sm:$0xf]
      %698 = vrot.lane.b32.xlu0 %v182, 80
      %v699 = vpop.permute.xlu0 %698
      %700 = vrot.lane.b32.xlu0 %v183, 80
      %v701 = vpop.permute.xlu0 %700
      %702 = vrot.lane.b32.xlu0 %v184, 80
      %v703 = vpop.permute.xlu0 %702
      %704 = vrot.lane.b32.xlu0 %v190, 80
      %v705 = vpop.permute.xlu0 %704
      %706 = vrot.lane.b32.xlu0 %v185, 80
      %v707 = vpop.permute.xlu0 %706
      %708 = vrot.lane.b32.xlu0 %v186, 80
      %v709 = vpop.permute.xlu0 %708
      %710 = vrot.lane.b32.xlu0 %v187, 80
      %v711 = vpop.permute.xlu0 %710
      %712 = vrot.lane.b32.xlu0 %v191, 80
      %v713 = vpop.permute.xlu0 %712
      %vm714 = vcmask 654336
      %v715 = vsel %vm714, %v699, %v701
      %v716 = vsel %vm714, %v701, %v703
      %v717 = vsel %vm714, %v703, %v705
      %v718 = vsel %vm714, %v707, %v709
      %v719 = vsel %vm714, %v709, %v711
      %v720 = vsel %vm714, %v711, %v713
      %v728 = vsel %vm229, %v697, 0
      %730 = vmatprep.subr.mxu0 %v716
      %731 = vmatpush1.msra.mxu0 %v715
      %732 = vmatprep.subr.mxu0 %v719
      %733 = vmatpush1.msra.mxu0 %v718
      %734 = vmatprep.subr.mxu0 0.0
      %735 = vmatpush1.msra.mxu0 0.0
      %736 = vmatprep.subr.mxu0 0.0
      %737 = vmatpush1.msra.mxu0 0.0
      %738 = vmatprep.subr.mxu0 0.0
      %739 = vmatpush1.msra.mxu0 0.0
      %740 = vmatprep.subr.mxu0 0.0
      %741 = vmatpush1.msra.mxu0 0.0
      %742 = vmatprep.subr.mxu0 0.0
      %743 = vmatpush1.msra.mxu0 0.0
      %744 = vmatprep.subr.mxu0 0.0
      %745 = vmatpush1.msra.mxu0 0.0
      %746 = vmatprep.subr.mxu0 0.0
      %747 = vmatpush1.msra.mxu0 0.0
      %748 = vmatprep.subr.mxu0 0.0
      %749 = vmatpush1.msra.mxu0 0.0
      %750 = vmatprep.subr.mxu0 0.0
      %751 = vmatpush1.msra.mxu0 0.0
      %752 = vmatprep.subr.mxu0 0.0
      %753 = vmatpush1.msra.mxu0 0.0
      %754 = vmatprep.subr.mxu0 0.0
      %755 = vmatpush1.msra.mxu0 0.0
      %756 = vmatprep.subr.mxu0 0.0
      %757 = vmatpush1.msra.mxu0 0.0
      %758 = vmatprep.subr.mxu0 0.0
      %759 = vmatpush1.msra.mxu0 0.0
      %760 = vmatprep.subr.mxu0 0.0
      %761 = vmatpush1.msra.mxu0 0.0
      %762 = vmatprep.subr.mxu0 0.0
      %763 = vmatpush1.msra.mxu0 0.0
      %764 = vmatprep.subr.mxu0 0.0
      %765 = vmatpush1.msra.mxu0 0.0
      %766 = vmatprep.subr.mxu0 0.0
      %767 = vmatpush1.msra.mxu0 0.0
      %768 = vmatprep.subr.mxu0 0.0
      %769 = vmatpush1.msra.mxu0 0.0
      %770 = vmatprep.subr.mxu0 0.0
      %771 = vmatpush1.msra.mxu0 0.0
      %772 = vmatprep.subr.mxu0 0.0
      %773 = vmatpush1.msra.mxu0 0.0
      %774 = vmatprep.subr.mxu0 0.0
      %775 = vmatpush1.msra.mxu0 0.0
      %776 = vmatprep.subr.mxu0 0.0
      %777 = vmatpush1.msra.mxu0 0.0
      %778 = vmatprep.subr.mxu0 0.0
      %779 = vmatpush1.msra.mxu0 0.0
      %780 = vmatprep.subr.mxu0 0.0
      %781 = vmatpush1.msra.mxu0 0.0
      %782 = vmatprep.subr.mxu0 0.0
      %783 = vmatpush1.msra.mxu0 0.0
      %784 = vmatprep.subr.mxu0 0.0
      %785 = vmatpush1.msra.mxu0 0.0
      %786 = vmatprep.subr.mxu0 0.0
      %787 = vmatpush1.msra.mxu0 0.0
      %788 = vmatprep.subr.mxu0 0.0
      %789 = vmatpush1.msra.mxu0 0.0
      %790 = vmatprep.subr.mxu0 0.0
      %791 = vmatpush1.msra.mxu0 0.0
      %792 = vmatprep.subr.mxu0 0.0
      %793 = vmatpush1.msra.mxu0 0.0
      %794 = vmatprep.mubr.f32.mxu0 0.0
      %795 = vmatmul.mubr.f32.gmra.mrb[0].mxu0 %v728
      %v796 = vpop.f32.mrb[0].mxu0
      %v797 = vadd.f32 0.0, %v796
      %v798 = vpop.f32.mrb[0].mxu0
      %v799 = vadd.f32 0.0, %v798
      %800 = vdwg.mxu0
      %801 = vmatprep.subr.mxu0 0.0
      %802 = vmatpush1.msra.mxu0 %v717
      %803 = vmatprep.subr.mxu0 0.0
      %804 = vmatpush1.msra.mxu0 %v720
      %805 = vmatprep.subr.mxu0 0.0
      %806 = vmatpush1.msra.mxu0 0.0
      %807 = vmatprep.subr.mxu0 0.0
      %808 = vmatpush1.msra.mxu0 0.0
      %809 = vmatprep.subr.mxu0 0.0
      %810 = vmatpush1.msra.mxu0 0.0
      %811 = vmatprep.subr.mxu0 0.0
      %812 = vmatpush1.msra.mxu0 0.0
      %813 = vmatprep.subr.mxu0 0.0
      %814 = vmatpush1.msra.mxu0 0.0
      %815 = vmatprep.subr.mxu0 0.0
      %816 = vmatpush1.msra.mxu0 0.0
      %817 = vmatprep.subr.mxu0 0.0
      %818 = vmatpush1.msra.mxu0 0.0
      %819 = vmatprep.subr.mxu0 0.0
      %820 = vmatpush1.msra.mxu0 0.0
      %821 = vmatprep.subr.mxu0 0.0
      %822 = vmatpush1.msra.mxu0 0.0
      %823 = vmatprep.subr.mxu0 0.0
      %824 = vmatpush1.msra.mxu0 0.0
      %825 = vmatprep.subr.mxu0 0.0
      %826 = vmatpush1.msra.mxu0 0.0
      %827 = vmatprep.subr.mxu0 0.0
      %828 = vmatpush1.msra.mxu0 0.0
      %829 = vmatprep.subr.mxu0 0.0
      %830 = vmatpush1.msra.mxu0 0.0
      %831 = vmatprep.subr.mxu0 0.0
      %832 = vmatpush1.msra.mxu0 0.0
      %833 = vmatprep.subr.mxu0 0.0
      %834 = vmatpush1.msra.mxu0 0.0
      %835 = vmatprep.subr.mxu0 0.0
      %836 = vmatpush1.msra.mxu0 0.0
      %837 = vmatprep.subr.mxu0 0.0
      %838 = vmatpush1.msra.mxu0 0.0
      %839 = vmatprep.subr.mxu0 0.0
      %840 = vmatpush1.msra.mxu0 0.0
      %841 = vmatprep.subr.mxu0 0.0
      %842 = vmatpush1.msra.mxu0 0.0
      %843 = vmatprep.subr.mxu0 0.0
      %844 = vmatpush1.msra.mxu0 0.0
      %845 = vmatprep.subr.mxu0 0.0
      %846 = vmatpush1.msra.mxu0 0.0
      %847 = vmatprep.subr.mxu0 0.0
      %848 = vmatpush1.msra.mxu0 0.0
      %849 = vmatprep.subr.mxu0 0.0
      %850 = vmatpush1.msra.mxu0 0.0
      %851 = vmatprep.subr.mxu0 0.0
      %852 = vmatpush1.msra.mxu0 0.0
      %853 = vmatprep.subr.mxu0 0.0
      %854 = vmatpush1.msra.mxu0 0.0
      %855 = vmatprep.subr.mxu0 0.0
      %856 = vmatpush1.msra.mxu0 0.0
      %857 = vmatprep.subr.mxu0 0.0
      %858 = vmatpush1.msra.mxu0 0.0
      %859 = vmatprep.subr.mxu0 0.0
      %860 = vmatpush1.msra.mxu0 0.0
      %861 = vmatprep.subr.mxu0 0.0
      %862 = vmatpush1.msra.mxu0 0.0
      %863 = vmatprep.subr.mxu0 0.0
      %864 = vmatpush1.msra.mxu0 0.0
      %865 = vmatprep.mubr.f32.mxu0 0.0
      %866 = vmatmul.mubr.f32.gmra.mrb[0].mxu0 %v728
      %v867 = vpop.f32.mrb[0].mxu0
      %v868 = vadd.f32 0.0, %v867
      %v869 = vpop.f32.mrb[0].mxu0
      %870 = vdwg.mxu0
      %v871 = vadd.f32 %v693, %v797
      %v872 = vadd.f32 %v694, %v799
      %v873 = vadd.f32 %v695, %v868
      %s874 = scalar_lea.vmem %s1, 16
      %v875 = vld [vmem:[%s874] sm:$0xf]
      %876 = vrot.lane.b32.xlu0 %v182, 78
      %v877 = vpop.permute.xlu0 %876
      %878 = vrot.lane.b32.xlu0 %v183, 78
      %v879 = vpop.permute.xlu0 %878
      %880 = vrot.lane.b32.xlu0 %v184, 78
      %v881 = vpop.permute.xlu0 %880
      %882 = vrot.lane.b32.xlu0 %v190, 78
      %v883 = vpop.permute.xlu0 %882
      %884 = vrot.lane.b32.xlu0 %v185, 78
      %v885 = vpop.permute.xlu0 %884
      %886 = vrot.lane.b32.xlu0 %v186, 78
      %v887 = vpop.permute.xlu0 %886
      %888 = vrot.lane.b32.xlu0 %v187, 78
      %v889 = vpop.permute.xlu0 %888
      %890 = vrot.lane.b32.xlu0 %v191, 78
      %v891 = vpop.permute.xlu0 %890
      %vm892 = vcmask 637952
      %v893 = vsel %vm892, %v877, %v879
      %v894 = vsel %vm892, %v879, %v881
      %v895 = vsel %vm892, %v881, %v883
      %v896 = vsel %vm892, %v885, %v887
      %v897 = vsel %vm892, %v887, %v889
      %v898 = vsel %vm892, %v889, %v891
      %v906 = vsel %vm229, %v875, 0
      %908 = vmatprep.subr.mxu0 %v894
      %909 = vmatpush1.msra.mxu0 %v893
      %910 = vmatprep.subr.mxu0 %v897
      %911 = vmatpush1.msra.mxu0 %v896
      %912 = vmatprep.subr.mxu0 0.0
      %913 = vmatpush1.msra.mxu0 0.0
      %914 = vmatprep.subr.mxu0 0.0
      %915 = vmatpush1.msra.mxu0 0.0
      %916 = vmatprep.subr.mxu0 0.0
      %917 = vmatpush1.msra.mxu0 0.0
      %918 = vmatprep.subr.mxu0 0.0
      %919 = vmatpush1.msra.mxu0 0.0
      %920 = vmatprep.subr.mxu0 0.0
      %921 = vmatpush1.msra.mxu0 0.0
      %922 = vmatprep.subr.mxu0 0.0
      %923 = vmatpush1.msra.mxu0 0.0
      %924 = vmatprep.subr.mxu0 0.0
      %925 = vmatpush1.msra.mxu0 0.0
      %926 = vmatprep.subr.mxu0 0.0
      %927 = vmatpush1.msra.mxu0 0.0
      %928 = vmatprep.subr.mxu0 0.0
      %929 = vmatpush1.msra.mxu0 0.0
      %930 = vmatprep.subr.mxu0 0.0
      %931 = vmatpush1.msra.mxu0 0.0
      %932 = vmatprep.subr.mxu0 0.0
      %933 = vmatpush1.msra.mxu0 0.0
      %934 = vmatprep.subr.mxu0 0.0
      %935 = vmatpush1.msra.mxu0 0.0
      %936 = vmatprep.subr.mxu0 0.0
      %937 = vmatpush1.msra.mxu0 0.0
      %938 = vmatprep.subr.mxu0 0.0
      %939 = vmatpush1.msra.mxu0 0.0
      %940 = vmatprep.subr.mxu0 0.0
      %941 = vmatpush1.msra.mxu0 0.0
      %942 = vmatprep.subr.mxu0 0.0
      %943 = vmatpush1.msra.mxu0 0.0
      %944 = vmatprep.subr.mxu0 0.0
      %945 = vmatpush1.msra.mxu0 0.0
      %946 = vmatprep.subr.mxu0 0.0
      %947 = vmatpush1.msra.mxu0 0.0
      %948 = vmatprep.subr.mxu0 0.0
      %949 = vmatpush1.msra.mxu0 0.0
      %950 = vmatprep.subr.mxu0 0.0
      %951 = vmatpush1.msra.mxu0 0.0
      %952 = vmatprep.subr.mxu0 0.0
      %953 = vmatpush1.msra.mxu0 0.0
      %954 = vmatprep.subr.mxu0 0.0
      %955 = vmatpush1.msra.mxu0 0.0
      %956 = vmatprep.subr.mxu0 0.0
      %957 = vmatpush1.msra.mxu0 0.0
      %958 = vmatprep.subr.mxu0 0.0
      %959 = vmatpush1.msra.mxu0 0.0
      %960 = vmatprep.subr.mxu0 0.0
      %961 = vmatpush1.msra.mxu0 0.0
      %962 = vmatprep.subr.mxu0 0.0
      %963 = vmatpush1.msra.mxu0 0.0
      %964 = vmatprep.subr.mxu0 0.0
      %965 = vmatpush1.msra.mxu0 0.0
      %966 = vmatprep.subr.mxu0 0.0
      %967 = vmatpush1.msra.mxu0 0.0
      %968 = vmatprep.subr.mxu0 0.0
      %969 = vmatpush1.msra.mxu0 0.0
      %970 = vmatprep.subr.mxu0 0.0
      %971 = vmatpush1.msra.mxu0 0.0
      %972 = vmatprep.mubr.f32.mxu0 0.0
      %973 = vmatmul.mubr.f32.gmra.mrb[0].mxu0 %v906
      %v974 = vpop.f32.mrb[0].mxu0
      %v975 = vadd.f32 0.0, %v974
      %v976 = vpop.f32.mrb[0].mxu0
      %v977 = vadd.f32 0.0, %v976
      %978 = vdwg.mxu0
      %979 = vmatprep.subr.mxu0 0.0
      %980 = vmatpush1.msra.mxu0 %v895
      %981 = vmatprep.subr.mxu0 0.0
      %982 = vmatpush1.msra.mxu0 %v898
      %983 = vmatprep.subr.mxu0 0.0
      %984 = vmatpush1.msra.mxu0 0.0
      %985 = vmatprep.subr.mxu0 0.0
      %986 = vmatpush1.msra.mxu0 0.0
      %987 = vmatprep.subr.mxu0 0.0
      %988 = vmatpush1.msra.mxu0 0.0
      %989 = vmatprep.subr.mxu0 0.0
      %990 = vmatpush1.msra.mxu0 0.0
      %991 = vmatprep.subr.mxu0 0.0
      %992 = vmatpush1.msra.mxu0 0.0
      %993 = vmatprep.subr.mxu0 0.0
      %994 = vmatpush1.msra.mxu0 0.0
      %995 = vmatprep.subr.mxu0 0.0
      %996 = vmatpush1.msra.mxu0 0.0
      %997 = vmatprep.subr.mxu0 0.0
      %998 = vmatpush1.msra.mxu0 0.0
      %999 = vmatprep.subr.mxu0 0.0
      %1000 = vmatpush1.msra.mxu0 0.0
      %1001 = vmatprep.subr.mxu0 0.0
      %1002 = vmatpush1.msra.mxu0 0.0
      %1003 = vmatprep.subr.mxu0 0.0
      %1004 = vmatpush1.msra.mxu0 0.0
      %1005 = vmatprep.subr.mxu0 0.0
      %1006 = vmatpush1.msra.mxu0 0.0
      %1007 = vmatprep.subr.mxu0 0.0
      %1008 = vmatpush1.msra.mxu0 0.0
      %1009 = vmatprep.subr.mxu0 0.0
      %1010 = vmatpush1.msra.mxu0 0.0
      %1011 = vmatprep.subr.mxu0 0.0
      %1012 = vmatpush1.msra.mxu0 0.0
      %1013 = vmatprep.subr.mxu0 0.0
      %1014 = vmatpush1.msra.mxu0 0.0
      %1015 = vmatprep.subr.mxu0 0.0
      %1016 = vmatpush1.msra.mxu0 0.0
      %1017 = vmatprep.subr.mxu0 0.0
      %1018 = vmatpush1.msra.mxu0 0.0
      %1019 = vmatprep.subr.mxu0 0.0
      %1020 = vmatpush1.msra.mxu0 0.0
      %1021 = vmatprep.subr.mxu0 0.0
      %1022 = vmatpush1.msra.mxu0 0.0
      %1023 = vmatprep.subr.mxu0 0.0
      %1024 = vmatpush1.msra.mxu0 0.0
      %1025 = vmatprep.subr.mxu0 0.0
      %1026 = vmatpush1.msra.mxu0 0.0
      %1027 = vmatprep.subr.mxu0 0.0
      %1028 = vmatpush1.msra.mxu0 0.0
      %1029 = vmatprep.subr.mxu0 0.0
      %1030 = vmatpush1.msra.mxu0 0.0
      %1031 = vmatprep.subr.mxu0 0.0
      %1032 = vmatpush1.msra.mxu0 0.0
      %1033 = vmatprep.subr.mxu0 0.0
      %1034 = vmatpush1.msra.mxu0 0.0
      %1035 = vmatprep.subr.mxu0 0.0
      %1036 = vmatpush1.msra.mxu0 0.0
      %1037 = vmatprep.subr.mxu0 0.0
      %1038 = vmatpush1.msra.mxu0 0.0
      %1039 = vmatprep.subr.mxu0 0.0
      %1040 = vmatpush1.msra.mxu0 0.0
      %1041 = vmatprep.subr.mxu0 0.0
      %1042 = vmatpush1.msra.mxu0 0.0
      %1043 = vmatprep.mubr.f32.mxu0 0.0
      %1044 = vmatmul.mubr.f32.gmra.mrb[0].mxu0 %v906
      %v1045 = vpop.f32.mrb[0].mxu0
      %v1046 = vadd.f32 0.0, %v1045
      %v1047 = vpop.f32.mrb[0].mxu0
      %1048 = vdwg.mxu0
      %v1049 = vadd.f32 %v871, %v975
      %v1050 = vadd.f32 %v872, %v977
      %v1051 = vadd.f32 %v873, %v1046
      %s1052 = scalar_lea.vmem %s1, 20
      %v1053 = vld [vmem:[%s1052] sm:$0xf]
      %1054 = vrot.lane.b32.xlu0 %v182, 76
      %v1055 = vpop.permute.xlu0 %1054
      %1056 = vrot.lane.b32.xlu0 %v183, 76
      %v1057 = vpop.permute.xlu0 %1056
      %1058 = vrot.lane.b32.xlu0 %v184, 76
      %v1059 = vpop.permute.xlu0 %1058
      %1060 = vrot.lane.b32.xlu0 %v190, 76
      %v1061 = vpop.permute.xlu0 %1060
      %1062 = vrot.lane.b32.xlu0 %v185, 76
      %v1063 = vpop.permute.xlu0 %1062
      %1064 = vrot.lane.b32.xlu0 %v186, 76
      %v1065 = vpop.permute.xlu0 %1064
      %1066 = vrot.lane.b32.xlu0 %v187, 76
      %v1067 = vpop.permute.xlu0 %1066
      %1068 = vrot.lane.b32.xlu0 %v191, 76
      %v1069 = vpop.permute.xlu0 %1068
      %vm1070 = vcmask 621568
      %v1071 = vsel %vm1070, %v1055, %v1057
      %v1072 = vsel %vm1070, %v1057, %v1059
      %v1073 = vsel %vm1070, %v1059, %v1061
      %v1074 = vsel %vm1070, %v1063, %v1065
      %v1075 = vsel %vm1070, %v1065, %v1067
      %v1076 = vsel %vm1070, %v1067, %v1069
      %v1084 = vsel %vm229, %v1053, 0
      %1086 = vmatprep.subr.mxu0 %v1072
      %1087 = vmatpush1.msra.mxu0 %v1071
      %1088 = vmatprep.subr.mxu0 %v1075
      %1089 = vmatpush1.msra.mxu0 %v1074
      %1090 = vmatprep.subr.mxu0 0.0
      %1091 = vmatpush1.msra.mxu0 0.0
      %1092 = vmatprep.subr.mxu0 0.0
      %1093 = vmatpush1.msra.mxu0 0.0
      %1094 = vmatprep.subr.mxu0 0.0
      %1095 = vmatpush1.msra.mxu0 0.0
      %1096 = vmatprep.subr.mxu0 0.0
      %1097 = vmatpush1.msra.mxu0 0.0
      %1098 = vmatprep.subr.mxu0 0.0
      %1099 = vmatpush1.msra.mxu0 0.0
      %1100 = vmatprep.subr.mxu0 0.0
      %1101 = vmatpush1.msra.mxu0 0.0
      %1102 = vmatprep.subr.mxu0 0.0
      %1103 = vmatpush1.msra.mxu0 0.0
      %1104 = vmatprep.subr.mxu0 0.0
      %1105 = vmatpush1.msra.mxu0 0.0
      %1106 = vmatprep.subr.mxu0 0.0
      %1107 = vmatpush1.msra.mxu0 0.0
      %1108 = vmatprep.subr.mxu0 0.0
      %1109 = vmatpush1.msra.mxu0 0.0
      %1110 = vmatprep.subr.mxu0 0.0
      %1111 = vmatpush1.msra.mxu0 0.0
      %1112 = vmatprep.subr.mxu0 0.0
      %1113 = vmatpush1.msra.mxu0 0.0
      %1114 = vmatprep.subr.mxu0 0.0
      %1115 = vmatpush1.msra.mxu0 0.0
      %1116 = vmatprep.subr.mxu0 0.0
      %1117 = vmatpush1.msra.mxu0 0.0
      %1118 = vmatprep.subr.mxu0 0.0
      %1119 = vmatpush1.msra.mxu0 0.0
      %1120 = vmatprep.subr.mxu0 0.0
      %1121 = vmatpush1.msra.mxu0 0.0
      %1122 = vmatprep.subr.mxu0 0.0
      %1123 = vmatpush1.msra.mxu0 0.0
      %1124 = vmatprep.subr.mxu0 0.0
      %1125 = vmatpush1.msra.mxu0 0.0
      %1126 = vmatprep.subr.mxu0 0.0
      %1127 = vmatpush1.msra.mxu0 0.0
      %1128 = vmatprep.subr.mxu0 0.0
      %1129 = vmatpush1.msra.mxu0 0.0
      %1130 = vmatprep.subr.mxu0 0.0
      %1131 = vmatpush1.msra.mxu0 0.0
      %1132 = vmatprep.subr.mxu0 0.0
      %1133 = vmatpush1.msra.mxu0 0.0
      %1134 = vmatprep.subr.mxu0 0.0
      %1135 = vmatpush1.msra.mxu0 0.0
      %1136 = vmatprep.subr.mxu0 0.0
      %1137 = vmatpush1.msra.mxu0 0.0
      %1138 = vmatprep.subr.mxu0 0.0
      %1139 = vmatpush1.msra.mxu0 0.0
      %1140 = vmatprep.subr.mxu0 0.0
      %1141 = vmatpush1.msra.mxu0 0.0
      %1142 = vmatprep.subr.mxu0 0.0
      %1143 = vmatpush1.msra.mxu0 0.0
      %1144 = vmatprep.subr.mxu0 0.0
      %1145 = vmatpush1.msra.mxu0 0.0
      %1146 = vmatprep.subr.mxu0 0.0
      %1147 = vmatpush1.msra.mxu0 0.0
      %1148 = vmatprep.subr.mxu0 0.0
      %1149 = vmatpush1.msra.mxu0 0.0
      %1150 = vmatprep.mubr.f32.mxu0 0.0
      %1151 = vmatmul.mubr.f32.gmra.mrb[0].mxu0 %v1084
      %v1152 = vpop.f32.mrb[0].mxu0
      %v1153 = vadd.f32 0.0, %v1152
      %v1154 = vpop.f32.mrb[0].mxu0
      %v1155 = vadd.f32 0.0, %v1154
      %1156 = vdwg.mxu0
      %1157 = vmatprep.subr.mxu0 0.0
      %1158 = vmatpush1.msra.mxu0 %v1073
      %1159 = vmatprep.subr.mxu0 0.0
      %1160 = vmatpush1.msra.mxu0 %v1076
      %1161 = vmatprep.subr.mxu0 0.0
      %1162 = vmatpush1.msra.mxu0 0.0
      %1163 = vmatprep.subr.mxu0 0.0
      %1164 = vmatpush1.msra.mxu0 0.0
      %1165 = vmatprep.subr.mxu0 0.0
      %1166 = vmatpush1.msra.mxu0 0.0
      %1167 = vmatprep.subr.mxu0 0.0
      %1168 = vmatpush1.msra.mxu0 0.0
      %1169 = vmatprep.subr.mxu0 0.0
      %1170 = vmatpush1.msra.mxu0 0.0
      %1171 = vmatprep.subr.mxu0 0.0
      %1172 = vmatpush1.msra.mxu0 0.0
      %1173 = vmatprep.subr.mxu0 0.0
      %1174 = vmatpush1.msra.mxu0 0.0
      %1175 = vmatprep.subr.mxu0 0.0
      %1176 = vmatpush1.msra.mxu0 0.0
      %1177 = vmatprep.subr.mxu0 0.0
      %1178 = vmatpush1.msra.mxu0 0.0
      %1179 = vmatprep.subr.mxu0 0.0
      %1180 = vmatpush1.msra.mxu0 0.0
      %1181 = vmatprep.subr.mxu0 0.0
      %1182 = vmatpush1.msra.mxu0 0.0
      %1183 = vmatprep.subr.mxu0 0.0
      %1184 = vmatpush1.msra.mxu0 0.0
      %1185 = vmatprep.subr.mxu0 0.0
      %1186 = vmatpush1.msra.mxu0 0.0
      %1187 = vmatprep.subr.mxu0 0.0
      %1188 = vmatpush1.msra.mxu0 0.0
      %1189 = vmatprep.subr.mxu0 0.0
      %1190 = vmatpush1.msra.mxu0 0.0
      %1191 = vmatprep.subr.mxu0 0.0
      %1192 = vmatpush1.msra.mxu0 0.0
      %1193 = vmatprep.subr.mxu0 0.0
      %1194 = vmatpush1.msra.mxu0 0.0
      %1195 = vmatprep.subr.mxu0 0.0
      %1196 = vmatpush1.msra.mxu0 0.0
      %1197 = vmatprep.subr.mxu0 0.0
      %1198 = vmatpush1.msra.mxu0 0.0
      %1199 = vmatprep.subr.mxu0 0.0
      %1200 = vmatpush1.msra.mxu0 0.0
      %1201 = vmatprep.subr.mxu0 0.0
      %1202 = vmatpush1.msra.mxu0 0.0
      %1203 = vmatprep.subr.mxu0 0.0
      %1204 = vmatpush1.msra.mxu0 0.0
      %1205 = vmatprep.subr.mxu0 0.0
      %1206 = vmatpush1.msra.mxu0 0.0
      %1207 = vmatprep.subr.mxu0 0.0
      %1208 = vmatpush1.msra.mxu0 0.0
      %1209 = vmatprep.subr.mxu0 0.0
      %1210 = vmatpush1.msra.mxu0 0.0
      %1211 = vmatprep.subr.mxu0 0.0
      %1212 = vmatpush1.msra.mxu0 0.0
      %1213 = vmatprep.subr.mxu0 0.0
      %1214 = vmatpush1.msra.mxu0 0.0
      %1215 = vmatprep.subr.mxu0 0.0
      %1216 = vmatpush1.msra.mxu0 0.0
      %1217 = vmatprep.subr.mxu0 0.0
      %1218 = vmatpush1.msra.mxu0 0.0
      %1219 = vmatprep.subr.mxu0 0.0
      %1220 = vmatpush1.msra.mxu0 0.0
      %1221 = vmatprep.mubr.f32.mxu0 0.0
      %1222 = vmatmul.mubr.f32.gmra.mrb[0].mxu0 %v1084
      %v1223 = vpop.f32.mrb[0].mxu0
      %v1224 = vadd.f32 0.0, %v1223
      %v1225 = vpop.f32.mrb[0].mxu0
      %1226 = vdwg.mxu0
      %v1227 = vadd.f32 %v1049, %v1153
      %v1228 = vadd.f32 %v1050, %v1155
      %v1229 = vadd.f32 %v1051, %v1224
      %s1230 = scalar_lea.vmem %s1, 24
      %v1231 = vld [vmem:[%s1230] sm:$0xf]
      %1232 = vrot.lane.b32.xlu0 %v182, 32
      %v1233 = vpop.permute.xlu0 %1232
      %1234 = vrot.lane.b32.xlu0 %v183, 32
      %v1235 = vpop.permute.xlu0 %1234
      %1236 = vrot.lane.b32.xlu0 %v184, 32
      %v1237 = vpop.permute.xlu0 %1236
      %1238 = vrot.lane.b32.xlu0 %v190, 32
      %v1239 = vpop.permute.xlu0 %1238
      %1240 = vrot.lane.b32.xlu0 %v185, 32
      %v1241 = vpop.permute.xlu0 %1240
      %1242 = vrot.lane.b32.xlu0 %v186, 32
      %v1243 = vpop.permute.xlu0 %1242
      %1244 = vrot.lane.b32.xlu0 %v187, 32
      %v1245 = vpop.permute.xlu0 %1244
      %1246 = vrot.lane.b32.xlu0 %v191, 32
      %v1247 = vpop.permute.xlu0 %1246
      %vm1248 = vcmask 261120
      %v1249 = vsel %vm1248, %v1233, %v1235
      %v1250 = vsel %vm1248, %v1235, %v1237
      %v1251 = vsel %vm1248, %v1237, %v1239
      %v1252 = vsel %vm1248, %v1241, %v1243
      %v1253 = vsel %vm1248, %v1243, %v1245
      %v1254 = vsel %vm1248, %v1245, %v1247
      %v1262 = vsel %vm229, %v1231, 0
      %1264 = vmatprep.subr.mxu0 %v1250
      %1265 = vmatpush1.msra.mxu0 %v1249
      %1266 = vmatprep.subr.mxu0 %v1253
      %1267 = vmatpush1.msra.mxu0 %v1252
      %1268 = vmatprep.subr.mxu0 0.0
      %1269 = vmatpush1.msra.mxu0 0.0
      %1270 = vmatprep.subr.mxu0 0.0
      %1271 = vmatpush1.msra.mxu0 0.0
      %1272 = vmatprep.subr.mxu0 0.0
      %1273 = vmatpush1.msra.mxu0 0.0
      %1274 = vmatprep.subr.mxu0 0.0
      %1275 = vmatpush1.msra.mxu0 0.0
      %1276 = vmatprep.subr.mxu0 0.0
      %1277 = vmatpush1.msra.mxu0 0.0
      %1278 = vmatprep.subr.mxu0 0.0
      %1279 = vmatpush1.msra.mxu0 0.0
      %1280 = vmatprep.subr.mxu0 0.0
      %1281 = vmatpush1.msra.mxu0 0.0
      %1282 = vmatprep.subr.mxu0 0.0
      %1283 = vmatpush1.msra.mxu0 0.0
      %1284 = vmatprep.subr.mxu0 0.0
      %1285 = vmatpush1.msra.mxu0 0.0
      %1286 = vmatprep.subr.mxu0 0.0
      %1287 = vmatpush1.msra.mxu0 0.0
      %1288 = vmatprep.subr.mxu0 0.0
      %1289 = vmatpush1.msra.mxu0 0.0
      %1290 = vmatprep.subr.mxu0 0.0
      %1291 = vmatpush1.msra.mxu0 0.0
      %1292 = vmatprep.subr.mxu0 0.0
      %1293 = vmatpush1.msra.mxu0 0.0
      %1294 = vmatprep.subr.mxu0 0.0
      %1295 = vmatpush1.msra.mxu0 0.0
      %1296 = vmatprep.subr.mxu0 0.0
      %1297 = vmatpush1.msra.mxu0 0.0
      %1298 = vmatprep.subr.mxu0 0.0
      %1299 = vmatpush1.msra.mxu0 0.0
      %1300 = vmatprep.subr.mxu0 0.0
      %1301 = vmatpush1.msra.mxu0 0.0
      %1302 = vmatprep.subr.mxu0 0.0
      %1303 = vmatpush1.msra.mxu0 0.0
      %1304 = vmatprep.subr.mxu0 0.0
      %1305 = vmatpush1.msra.mxu0 0.0
      %1306 = vmatprep.subr.mxu0 0.0
      %1307 = vmatpush1.msra.mxu0 0.0
      %1308 = vmatprep.subr.mxu0 0.0
      %1309 = vmatpush1.msra.mxu0 0.0
      %1310 = vmatprep.subr.mxu0 0.0
      %1311 = vmatpush1.msra.mxu0 0.0
      %1312 = vmatprep.subr.mxu0 0.0
      %1313 = vmatpush1.msra.mxu0 0.0
      %1314 = vmatprep.subr.mxu0 0.0
      %1315 = vmatpush1.msra.mxu0 0.0
      %1316 = vmatprep.subr.mxu0 0.0
      %1317 = vmatpush1.msra.mxu0 0.0
      %1318 = vmatprep.subr.mxu0 0.0
      %1319 = vmatpush1.msra.mxu0 0.0
      %1320 = vmatprep.subr.mxu0 0.0
      %1321 = vmatpush1.msra.mxu0 0.0
      %1322 = vmatprep.subr.mxu0 0.0
      %1323 = vmatpush1.msra.mxu0 0.0
      %1324 = vmatprep.subr.mxu0 0.0
      %1325 = vmatpush1.msra.mxu0 0.0
      %1326 = vmatprep.subr.mxu0 0.0
      %1327 = vmatpush1.msra.mxu0 0.0
      %1328 = vmatprep.mubr.f32.mxu0 0.0
      %1329 = vmatmul.mubr.f32.gmra.mrb[0].mxu0 %v1262
      %v1330 = vpop.f32.mrb[0].mxu0
      %v1331 = vadd.f32 0.0, %v1330
      %v1332 = vpop.f32.mrb[0].mxu0
      %v1333 = vadd.f32 0.0, %v1332
      %1334 = vdwg.mxu0
      %1335 = vmatprep.subr.mxu0 0.0
      %1336 = vmatpush1.msra.mxu0 %v1251
      %1337 = vmatprep.subr.mxu0 0.0
      %1338 = vmatpush1.msra.mxu0 %v1254
      %1339 = vmatprep.subr.mxu0 0.0
      %1340 = vmatpush1.msra.mxu0 0.0
      %1341 = vmatprep.subr.mxu0 0.0
      %1342 = vmatpush1.msra.mxu0 0.0
      %1343 = vmatprep.subr.mxu0 0.0
      %1344 = vmatpush1.msra.mxu0 0.0
      %1345 = vmatprep.subr.mxu0 0.0
      %1346 = vmatpush1.msra.mxu0 0.0
      %1347 = vmatprep.subr.mxu0 0.0
      %1348 = vmatpush1.msra.mxu0 0.0
      %1349 = vmatprep.subr.mxu0 0.0
      %1350 = vmatpush1.msra.mxu0 0.0
      %1351 = vmatprep.subr.mxu0 0.0
      %1352 = vmatpush1.msra.mxu0 0.0
      %1353 = vmatprep.subr.mxu0 0.0
      %1354 = vmatpush1.msra.mxu0 0.0
      %1355 = vmatprep.subr.mxu0 0.0
      %1356 = vmatpush1.msra.mxu0 0.0
      %1357 = vmatprep.subr.mxu0 0.0
      %1358 = vmatpush1.msra.mxu0 0.0
      %1359 = vmatprep.subr.mxu0 0.0
      %1360 = vmatpush1.msra.mxu0 0.0
      %1361 = vmatprep.subr.mxu0 0.0
      %1362 = vmatpush1.msra.mxu0 0.0
      %1363 = vmatprep.subr.mxu0 0.0
      %1364 = vmatpush1.msra.mxu0 0.0
      %1365 = vmatprep.subr.mxu0 0.0
      %1366 = vmatpush1.msra.mxu0 0.0
      %1367 = vmatprep.subr.mxu0 0.0
      %1368 = vmatpush1.msra.mxu0 0.0
      %1369 = vmatprep.subr.mxu0 0.0
      %1370 = vmatpush1.msra.mxu0 0.0
      %1371 = vmatprep.subr.mxu0 0.0
      %1372 = vmatpush1.msra.mxu0 0.0
      %1373 = vmatprep.subr.mxu0 0.0
      %1374 = vmatpush1.msra.mxu0 0.0
      %1375 = vmatprep.subr.mxu0 0.0
      %1376 = vmatpush1.msra.mxu0 0.0
      %1377 = vmatprep.subr.mxu0 0.0
      %1378 = vmatpush1.msra.mxu0 0.0
      %1379 = vmatprep.subr.mxu0 0.0
      %1380 = vmatpush1.msra.mxu0 0.0
      %1381 = vmatprep.subr.mxu0 0.0
      %1382 = vmatpush1.msra.mxu0 0.0
      %1383 = vmatprep.subr.mxu0 0.0
      %1384 = vmatpush1.msra.mxu0 0.0
      %1385 = vmatprep.subr.mxu0 0.0
      %1386 = vmatpush1.msra.mxu0 0.0
      %1387 = vmatprep.subr.mxu0 0.0
      %1388 = vmatpush1.msra.mxu0 0.0
      %1389 = vmatprep.subr.mxu0 0.0
      %1390 = vmatpush1.msra.mxu0 0.0
      %1391 = vmatprep.subr.mxu0 0.0
      %1392 = vmatpush1.msra.mxu0 0.0
      %1393 = vmatprep.subr.mxu0 0.0
      %1394 = vmatpush1.msra.mxu0 0.0
      %1395 = vmatprep.subr.mxu0 0.0
      %1396 = vmatpush1.msra.mxu0 0.0
      %1397 = vmatprep.subr.mxu0 0.0
      %1398 = vmatpush1.msra.mxu0 0.0
      %1399 = vmatprep.mubr.f32.mxu0 0.0
      %1400 = vmatmul.mubr.f32.gmra.mrb[0].mxu0 %v1262
      %v1401 = vpop.f32.mrb[0].mxu0
      %v1402 = vadd.f32 0.0, %v1401
      %v1403 = vpop.f32.mrb[0].mxu0
      %1404 = vdwg.mxu0
      %v1405 = vadd.f32 %v1227, %v1331
      %v1406 = vadd.f32 %v1228, %v1333
      %v1407 = vadd.f32 %v1229, %v1402
      %s1408 = scalar_lea.vmem %s1, 28
      %v1409 = vld [vmem:[%s1408] sm:$0xf]
      %1410 = vrot.lane.b32.xlu0 %v182, 30
      %v1411 = vpop.permute.xlu0 %1410
      %1412 = vrot.lane.b32.xlu0 %v183, 30
      %v1413 = vpop.permute.xlu0 %1412
      %1414 = vrot.lane.b32.xlu0 %v184, 30
      %v1415 = vpop.permute.xlu0 %1414
      %1416 = vrot.lane.b32.xlu0 %v190, 30
      %v1417 = vpop.permute.xlu0 %1416
      %1418 = vrot.lane.b32.xlu0 %v185, 30
      %v1419 = vpop.permute.xlu0 %1418
      %1420 = vrot.lane.b32.xlu0 %v186, 30
      %v1421 = vpop.permute.xlu0 %1420
      %1422 = vrot.lane.b32.xlu0 %v187, 30
      %v1423 = vpop.permute.xlu0 %1422
      %1424 = vrot.lane.b32.xlu0 %v191, 30
      %v1425 = vpop.permute.xlu0 %1424
      %vm1426 = vcmask 244736
      %v1427 = vsel %vm1426, %v1411, %v1413
      %v1428 = vsel %vm1426, %v1413, %v1415
      %v1429 = vsel %vm1426, %v1415, %v1417
      %v1430 = vsel %vm1426, %v1419, %v1421
      %v1431 = vsel %vm1426, %v1421, %v1423
      %v1432 = vsel %vm1426, %v1423, %v1425
      %v1440 = vsel %vm229, %v1409, 0
      %1442 = vmatprep.subr.mxu0 %v1428
      %1443 = vmatpush1.msra.mxu0 %v1427
      %1444 = vmatprep.subr.mxu0 %v1431
      %1445 = vmatpush1.msra.mxu0 %v1430
      %1446 = vmatprep.subr.mxu0 0.0
      %1447 = vmatpush1.msra.mxu0 0.0
      %1448 = vmatprep.subr.mxu0 0.0
      %1449 = vmatpush1.msra.mxu0 0.0
      %1450 = vmatprep.subr.mxu0 0.0
      %1451 = vmatpush1.msra.mxu0 0.0
      %1452 = vmatprep.subr.mxu0 0.0
      %1453 = vmatpush1.msra.mxu0 0.0
      %1454 = vmatprep.subr.mxu0 0.0
      %1455 = vmatpush1.msra.mxu0 0.0
      %1456 = vmatprep.subr.mxu0 0.0
      %1457 = vmatpush1.msra.mxu0 0.0
      %1458 = vmatprep.subr.mxu0 0.0
      %1459 = vmatpush1.msra.mxu0 0.0
      %1460 = vmatprep.subr.mxu0 0.0
      %1461 = vmatpush1.msra.mxu0 0.0
      %1462 = vmatprep.subr.mxu0 0.0
      %1463 = vmatpush1.msra.mxu0 0.0
      %1464 = vmatprep.subr.mxu0 0.0
      %1465 = vmatpush1.msra.mxu0 0.0
      %1466 = vmatprep.subr.mxu0 0.0
      %1467 = vmatpush1.msra.mxu0 0.0
      %1468 = vmatprep.subr.mxu0 0.0
      %1469 = vmatpush1.msra.mxu0 0.0
      %1470 = vmatprep.subr.mxu0 0.0
      %1471 = vmatpush1.msra.mxu0 0.0
      %1472 = vmatprep.subr.mxu0 0.0
      %1473 = vmatpush1.msra.mxu0 0.0
      %1474 = vmatprep.subr.mxu0 0.0
      %1475 = vmatpush1.msra.mxu0 0.0
      %1476 = vmatprep.subr.mxu0 0.0
      %1477 = vmatpush1.msra.mxu0 0.0
      %1478 = vmatprep.subr.mxu0 0.0
      %1479 = vmatpush1.msra.mxu0 0.0
      %1480 = vmatprep.subr.mxu0 0.0
      %1481 = vmatpush1.msra.mxu0 0.0
      %1482 = vmatprep.subr.mxu0 0.0
      %1483 = vmatpush1.msra.mxu0 0.0
      %1484 = vmatprep.subr.mxu0 0.0
      %1485 = vmatpush1.msra.mxu0 0.0
      %1486 = vmatprep.subr.mxu0 0.0
      %1487 = vmatpush1.msra.mxu0 0.0
      %1488 = vmatprep.subr.mxu0 0.0
      %1489 = vmatpush1.msra.mxu0 0.0
      %1490 = vmatprep.subr.mxu0 0.0
      %1491 = vmatpush1.msra.mxu0 0.0
      %1492 = vmatprep.subr.mxu0 0.0
      %1493 = vmatpush1.msra.mxu0 0.0
      %1494 = vmatprep.subr.mxu0 0.0
      %1495 = vmatpush1.msra.mxu0 0.0
      %1496 = vmatprep.subr.mxu0 0.0
      %1497 = vmatpush1.msra.mxu0 0.0
      %1498 = vmatprep.subr.mxu0 0.0
      %1499 = vmatpush1.msra.mxu0 0.0
      %1500 = vmatprep.subr.mxu0 0.0
      %1501 = vmatpush1.msra.mxu0 0.0
      %1502 = vmatprep.subr.mxu0 0.0
      %1503 = vmatpush1.msra.mxu0 0.0
      %1504 = vmatprep.subr.mxu0 0.0
      %1505 = vmatpush1.msra.mxu0 0.0
      %1506 = vmatprep.mubr.f32.mxu0 0.0
      %1507 = vmatmul.mubr.f32.gmra.mrb[0].mxu0 %v1440
      %v1508 = vpop.f32.mrb[0].mxu0
      %v1509 = vadd.f32 0.0, %v1508
      %v1510 = vpop.f32.mrb[0].mxu0
      %v1511 = vadd.f32 0.0, %v1510
      %1512 = vdwg.mxu0
      %1513 = vmatprep.subr.mxu0 0.0
      %1514 = vmatpush1.msra.mxu0 %v1429
      %1515 = vmatprep.subr.mxu0 0.0
      %1516 = vmatpush1.msra.mxu0 %v1432
      %1517 = vmatprep.subr.mxu0 0.0
      %1518 = vmatpush1.msra.mxu0 0.0
      %1519 = vmatprep.subr.mxu0 0.0
      %1520 = vmatpush1.msra.mxu0 0.0
      %1521 = vmatprep.subr.mxu0 0.0
      %1522 = vmatpush1.msra.mxu0 0.0
      %1523 = vmatprep.subr.mxu0 0.0
      %1524 = vmatpush1.msra.mxu0 0.0
      %1525 = vmatprep.subr.mxu0 0.0
      %1526 = vmatpush1.msra.mxu0 0.0
      %1527 = vmatprep.subr.mxu0 0.0
      %1528 = vmatpush1.msra.mxu0 0.0
      %1529 = vmatprep.subr.mxu0 0.0
      %1530 = vmatpush1.msra.mxu0 0.0
      %1531 = vmatprep.subr.mxu0 0.0
      %1532 = vmatpush1.msra.mxu0 0.0
      %1533 = vmatprep.subr.mxu0 0.0
      %1534 = vmatpush1.msra.mxu0 0.0
      %1535 = vmatprep.subr.mxu0 0.0
      %1536 = vmatpush1.msra.mxu0 0.0
      %1537 = vmatprep.subr.mxu0 0.0
      %1538 = vmatpush1.msra.mxu0 0.0
      %1539 = vmatprep.subr.mxu0 0.0
      %1540 = vmatpush1.msra.mxu0 0.0
      %1541 = vmatprep.subr.mxu0 0.0
      %1542 = vmatpush1.msra.mxu0 0.0
      %1543 = vmatprep.subr.mxu0 0.0
      %1544 = vmatpush1.msra.mxu0 0.0
      %1545 = vmatprep.subr.mxu0 0.0
      %1546 = vmatpush1.msra.mxu0 0.0
      %1547 = vmatprep.subr.mxu0 0.0
      %1548 = vmatpush1.msra.mxu0 0.0
      %1549 = vmatprep.subr.mxu0 0.0
      %1550 = vmatpush1.msra.mxu0 0.0
      %1551 = vmatprep.subr.mxu0 0.0
      %1552 = vmatpush1.msra.mxu0 0.0
      %1553 = vmatprep.subr.mxu0 0.0
      %1554 = vmatpush1.msra.mxu0 0.0
      %1555 = vmatprep.subr.mxu0 0.0
      %1556 = vmatpush1.msra.mxu0 0.0
      %1557 = vmatprep.subr.mxu0 0.0
      %1558 = vmatpush1.msra.mxu0 0.0
      %1559 = vmatprep.subr.mxu0 0.0
      %1560 = vmatpush1.msra.mxu0 0.0
      %1561 = vmatprep.subr.mxu0 0.0
      %1562 = vmatpush1.msra.mxu0 0.0
      %1563 = vmatprep.subr.mxu0 0.0
      %1564 = vmatpush1.msra.mxu0 0.0
      %1565 = vmatprep.subr.mxu0 0.0
      %1566 = vmatpush1.msra.mxu0 0.0
      %1567 = vmatprep.subr.mxu0 0.0
      %1568 = vmatpush1.msra.mxu0 0.0
      %1569 = vmatprep.subr.mxu0 0.0
      %1570 = vmatpush1.msra.mxu0 0.0
      %1571 = vmatprep.subr.mxu0 0.0
      %1572 = vmatpush1.msra.mxu0 0.0
      %1573 = vmatprep.subr.mxu0 0.0
      %1574 = vmatpush1.msra.mxu0 0.0
      %1575 = vmatprep.subr.mxu0 0.0
      %1576 = vmatpush1.msra.mxu0 0.0
      %1577 = vmatprep.mubr.f32.mxu0 0.0
      %1578 = vmatmul.mubr.f32.gmra.mrb[0].mxu0 %v1440
      %v1579 = vpop.f32.mrb[0].mxu0
      %v1580 = vadd.f32 0.0, %v1579
      %v1581 = vpop.f32.mrb[0].mxu0
      %1582 = vdwg.mxu0
      %v1583 = vadd.f32 %v1405, %v1509
      %v1584 = vadd.f32 %v1406, %v1511
      %v1585 = vadd.f32 %v1407, %v1580
      %s1586 = scalar_lea.vmem %s1, 32
      %v1587 = vld [vmem:[%s1586] sm:$0xf]
      %1588 = vrot.lane.b32.xlu0 %v182, 28
      %v1589 = vpop.permute.xlu0 %1588
      %1590 = vrot.lane.b32.xlu0 %v183, 28
      %v1591 = vpop.permute.xlu0 %1590
      %1592 = vrot.lane.b32.xlu0 %v184, 28
      %v1593 = vpop.permute.xlu0 %1592
      %1594 = vrot.lane.b32.xlu0 %v190, 28
      %v1595 = vpop.permute.xlu0 %1594
      %1596 = vrot.lane.b32.xlu0 %v185, 28
      %v1597 = vpop.permute.xlu0 %1596
      %1598 = vrot.lane.b32.xlu0 %v186, 28
      %v1599 = vpop.permute.xlu0 %1598
      %1600 = vrot.lane.b32.xlu0 %v187, 28
      %v1601 = vpop.permute.xlu0 %1600
      %1602 = vrot.lane.b32.xlu0 %v191, 28
      %v1603 = vpop.permute.xlu0 %1602
      %vm1604 = vcmask 228352
      %v1605 = vsel %vm1604, %v1589, %v1591
      %v1606 = vsel %vm1604, %v1591, %v1593
      %v1607 = vsel %vm1604, %v1593, %v1595
      %v1608 = vsel %vm1604, %v1597, %v1599
      %v1609 = vsel %vm1604, %v1599, %v1601
      %v1610 = vsel %vm1604, %v1601, %v1603
      %v1618 = vsel %vm229, %v1587, 0
      %1620 = vmatprep.subr.mxu0 %v1606
      %1621 = vmatpush1.msra.mxu0 %v1605
      %1622 = vmatprep.subr.mxu0 %v1609
      %1623 = vmatpush1.msra.mxu0 %v1608
      %1624 = vmatprep.subr.mxu0 0.0
      %1625 = vmatpush1.msra.mxu0 0.0
      %1626 = vmatprep.subr.mxu0 0.0
      %1627 = vmatpush1.msra.mxu0 0.0
      %1628 = vmatprep.subr.mxu0 0.0
      %1629 = vmatpush1.msra.mxu0 0.0
      %1630 = vmatprep.subr.mxu0 0.0
      %1631 = vmatpush1.msra.mxu0 0.0
      %1632 = vmatprep.subr.mxu0 0.0
      %1633 = vmatpush1.msra.mxu0 0.0
      %1634 = vmatprep.subr.mxu0 0.0
      %1635 = vmatpush1.msra.mxu0 0.0
      %1636 = vmatprep.subr.mxu0 0.0
      %1637 = vmatpush1.msra.mxu0 0.0
      %1638 = vmatprep.subr.mxu0 0.0
      %1639 = vmatpush1.msra.mxu0 0.0
      %1640 = vmatprep.subr.mxu0 0.0
      %1641 = vmatpush1.msra.mxu0 0.0
      %1642 = vmatprep.subr.mxu0 0.0
      %1643 = vmatpush1.msra.mxu0 0.0
      %1644 = vmatprep.subr.mxu0 0.0
      %1645 = vmatpush1.msra.mxu0 0.0
      %1646 = vmatprep.subr.mxu0 0.0
      %1647 = vmatpush1.msra.mxu0 0.0
      %1648 = vmatprep.subr.mxu0 0.0
      %1649 = vmatpush1.msra.mxu0 0.0
      %1650 = vmatprep.subr.mxu0 0.0
      %1651 = vmatpush1.msra.mxu0 0.0
      %1652 = vmatprep.subr.mxu0 0.0
      %1653 = vmatpush1.msra.mxu0 0.0
      %1654 = vmatprep.subr.mxu0 0.0
      %1655 = vmatpush1.msra.mxu0 0.0
      %1656 = vmatprep.subr.mxu0 0.0
      %1657 = vmatpush1.msra.mxu0 0.0
      %1658 = vmatprep.subr.mxu0 0.0
      %1659 = vmatpush1.msra.mxu0 0.0
      %1660 = vmatprep.subr.mxu0 0.0
      %1661 = vmatpush1.msra.mxu0 0.0
      %1662 = vmatprep.subr.mxu0 0.0
      %1663 = vmatpush1.msra.mxu0 0.0
      %1664 = vmatprep.subr.mxu0 0.0
      %1665 = vmatpush1.msra.mxu0 0.0
      %1666 = vmatprep.subr.mxu0 0.0
      %1667 = vmatpush1.msra.mxu0 0.0
      %1668 = vmatprep.subr.mxu0 0.0
      %1669 = vmatpush1.msra.mxu0 0.0
      %1670 = vmatprep.subr.mxu0 0.0
      %1671 = vmatpush1.msra.mxu0 0.0
      %1672 = vmatprep.subr.mxu0 0.0
      %1673 = vmatpush1.msra.mxu0 0.0
      %1674 = vmatprep.subr.mxu0 0.0
      %1675 = vmatpush1.msra.mxu0 0.0
      %1676 = vmatprep.subr.mxu0 0.0
      %1677 = vmatpush1.msra.mxu0 0.0
      %1678 = vmatprep.subr.mxu0 0.0
      %1679 = vmatpush1.msra.mxu0 0.0
      %1680 = vmatprep.subr.mxu0 0.0
      %1681 = vmatpush1.msra.mxu0 0.0
      %1682 = vmatprep.subr.mxu0 0.0
      %1683 = vmatpush1.msra.mxu0 0.0
      %1684 = vmatprep.mubr.f32.mxu0 0.0
      %1685 = vmatmul.mubr.f32.gmra.mrb[0].mxu0 %v1618
      %v1686 = vpop.f32.mrb[0].mxu0
      %v1687 = vadd.f32 0.0, %v1686
      %v1688 = vpop.f32.mrb[0].mxu0
      %v1689 = vadd.f32 0.0, %v1688
      %1690 = vdwg.mxu0
      %1691 = vmatprep.subr.mxu0 0.0
      %1692 = vmatpush1.msra.mxu0 %v1607
      %1693 = vmatprep.subr.mxu0 0.0
      %1694 = vmatpush1.msra.mxu0 %v1610
      %1695 = vmatprep.subr.mxu0 0.0
      %1696 = vmatpush1.msra.mxu0 0.0
      %1697 = vmatprep.subr.mxu0 0.0
      %1698 = vmatpush1.msra.mxu0 0.0
      %1699 = vmatprep.subr.mxu0 0.0
      %1700 = vmatpush1.msra.mxu0 0.0
      %1701 = vmatprep.subr.mxu0 0.0
      %1702 = vmatpush1.msra.mxu0 0.0
      %1703 = vmatprep.subr.mxu0 0.0
      %1704 = vmatpush1.msra.mxu0 0.0
      %1705 = vmatprep.subr.mxu0 0.0
      %1706 = vmatpush1.msra.mxu0 0.0
      %1707 = vmatprep.subr.mxu0 0.0
      %1708 = vmatpush1.msra.mxu0 0.0
      %1709 = vmatprep.subr.mxu0 0.0
      %1710 = vmatpush1.msra.mxu0 0.0
      %1711 = vmatprep.subr.mxu0 0.0
      %1712 = vmatpush1.msra.mxu0 0.0
      %1713 = vmatprep.subr.mxu0 0.0
      %1714 = vmatpush1.msra.mxu0 0.0
      %1715 = vmatprep.subr.mxu0 0.0
      %1716 = vmatpush1.msra.mxu0 0.0
      %1717 = vmatprep.subr.mxu0 0.0
      %1718 = vmatpush1.msra.mxu0 0.0
      %1719 = vmatprep.subr.mxu0 0.0
      %1720 = vmatpush1.msra.mxu0 0.0
      %1721 = vmatprep.subr.mxu0 0.0
      %1722 = vmatpush1.msra.mxu0 0.0
      %1723 = vmatprep.subr.mxu0 0.0
      %1724 = vmatpush1.msra.mxu0 0.0
      %1725 = vmatprep.subr.mxu0 0.0
      %1726 = vmatpush1.msra.mxu0 0.0
      %1727 = vmatprep.subr.mxu0 0.0
      %1728 = vmatpush1.msra.mxu0 0.0
      %1729 = vmatprep.subr.mxu0 0.0
      %1730 = vmatpush1.msra.mxu0 0.0
      %1731 = vmatprep.subr.mxu0 0.0
      %1732 = vmatpush1.msra.mxu0 0.0
      %1733 = vmatprep.subr.mxu0 0.0
      %1734 = vmatpush1.msra.mxu0 0.0
      %1735 = vmatprep.subr.mxu0 0.0
      %1736 = vmatpush1.msra.mxu0 0.0
      %1737 = vmatprep.subr.mxu0 0.0
      %1738 = vmatpush1.msra.mxu0 0.0
      %1739 = vmatprep.subr.mxu0 0.0
      %1740 = vmatpush1.msra.mxu0 0.0
      %1741 = vmatprep.subr.mxu0 0.0
      %1742 = vmatpush1.msra.mxu0 0.0
      %1743 = vmatprep.subr.mxu0 0.0
      %1744 = vmatpush1.msra.mxu0 0.0
      %1745 = vmatprep.subr.mxu0 0.0
      %1746 = vmatpush1.msra.mxu0 0.0
      %1747 = vmatprep.subr.mxu0 0.0
      %1748 = vmatpush1.msra.mxu0 0.0
      %1749 = vmatprep.subr.mxu0 0.0
      %1750 = vmatpush1.msra.mxu0 0.0
      %1751 = vmatprep.subr.mxu0 0.0
      %1752 = vmatpush1.msra.mxu0 0.0
      %1753 = vmatprep.subr.mxu0 0.0
      %1754 = vmatpush1.msra.mxu0 0.0
      %1755 = vmatprep.mubr.f32.mxu0 0.0
      %1756 = vmatmul.mubr.f32.gmra.mrb[0].mxu0 %v1618
      %v1757 = vpop.f32.mrb[0].mxu0
      %v1758 = vadd.f32 0.0, %v1757
      %v1759 = vpop.f32.mrb[0].mxu0
      %1760 = vdwg.mxu0
      %v1761 = vadd.f32 %v1583, %v1687
      %v1762 = vadd.f32 %v1584, %v1689
      %v1763 = vadd.f32 %v1585, %v1758
      %v1764 = vmax.f32 %v1761, 0.0
      %v1765 = vmax.f32 %v1762, 0.0
      %v1766 = vmax.f32 %v1763, 0.0
      %v1769 = vcombine.low %v1764, %v1765
      %1771 = vst [vmem:[%s179] sm:$0xff] %v1769
      %1772 = vst [vmem:[%s179 + $0x8] sm:$0xf] %v1766
      %s1773 = smul.u32 3, %s18
      %p1774 = scmp.lt.s32.totalorder %s17, 1
      %s1775 = scalar_select %p1774, %s17, 1
      %p1776 = scmp.lt.s32.totalorder %s1773, 5
      %s1777 = scalar_select %p1776, %s1773, 5
      %s1778 = smul.addr %s1775, 6
      %s1779 = sadd.s32 %s1777, %s1778
      %s1780 = smul.addr %s1779, 4
      %s1781 = scalar_lea.vmem %s2, %s1780
      // Predicated region
      $region29: #{_lambda_.3} parent=27 // pred_check
        %p1782 = pneg %p94
      $region30: #{_lambda_.3} parent=27 // pred_check_branch
        %1784 = sbr.rel (%p1782) target = $region32
      $region31: #{_lambda_.3} parent=27 // pred_region
        %s1785 = smul.u32 3, %s18
      $region32: #{_lambda_.3} parent=27 // pred_fallthru
        _
    $region28: #{_lambda_.3} parent=5 // pred_fallthru
      _
    %p1786 = scmp.le.s32.totalorder 2, %s8
    // Predicated region
    $region33: #{_lambda_.3} parent=5 // pred_check
      %p1787 = pneg %p1786
    $region34: #{_lambda_.3} parent=5 // pred_check_branch
      %1789 = sbr.rel (%p1787) target = $region36
    $region35: #{_lambda_.3} parent=5 // pred_region
      %s1790 = ssub.s32 %s8, 2
      // Predicated region
      $region37: #{_lambda_.3} parent=35 // pred_check
        %p1791 = pneg %p100
      $region38: #{_lambda_.3} parent=35 // pred_check_branch
        %1793 = sbr.rel (%p1791) target = $region40
      $region39: #{_lambda_.3} parent=35 // pred_region
        %s1794 = smul.u32 3, %s20
        %p1795 = scmp.lt.s32.totalorder %s19, 1
        %s1796 = scalar_select %p1795, %s19, 1
        %p1797 = scmp.lt.s32.totalorder %s1794, 5
        %s1798 = scalar_select %p1797, %s1794, 5
        %s1799 = smul.addr %s1796, 6
        %s1800 = sadd.s32 %s1798, %s1799
        %s1801 = smul.addr %s1800, 4
        %s1802 = scalar_lea.vmem %s2, %s1801
      $region40: #{_lambda_.3} parent=35 // pred_fallthru
        _
    $region36: #{_lambda_.3} parent=5 // pred_fallthru
      _
  $region6: #{_lambda_.3} parent=0 // loop_footer
    %s12 = sadd.s32 1, %s8
  $region7: #{_lambda_.3} parent=0 // loop_footer_branch
    %7 = sbr.rel target = $region3
  $region8: #{_lambda_.3} parent=0 // loop_exit
    _

</llo_original>
